<compile_context>
chip_gen: v7x
topology: tpu7x:2x2x1
jax: 0.10.0
libtpu: 0.0.40
codegen_flags: <defaults>
</compile_context>

<pallas_src>
import math

import jax
import jax.numpy as jnp
from jax.experimental import pallas as pl
from jax.experimental.pallas import tpu as pltpu

_LANE = 128
_H1, _H2 = 512, 256


def _round_up(x, m):
    return ((x + m - 1) // m) * m


def _cdiv(a, b):
    return -(-a // b)


def _discriminator_kernel(x_ref, w1_ref, b1_ref, w2_ref, b2_ref, w3_ref, b3_ref,
                          out_ref):
    # x tile arrives as f32; cast to bf16 on the VPU (hidden under MXU work) so
    # the HBM stream is a single f32 read with no separate wrapper cast pass.
    x = x_ref[...].astype(jnp.bfloat16)

    # Layer 1: Linear(D, 512) + LeakyReLU(0.2); bf16 MXU operands, f32 accum.
    h1 = jnp.dot(x, w1_ref[...], preferred_element_type=jnp.float32) + b1_ref[...]
    h1 = jnp.maximum(h1, 0.2 * h1)

    # Layer 2: Linear(512, 256) + LeakyReLU(0.2).
    h2 = jnp.dot(h1.astype(jnp.bfloat16), w2_ref[...],
                 preferred_element_type=jnp.float32) + b2_ref[...]
    h2 = jnp.maximum(h2, 0.2 * h2)

    # Layer 3: Linear(256, 1) as (tb,256) . (256,1) -> (tb,1): no transpose of
    # the large h2 activation; the tiny (tb,1) output block is cheap to store.
    out = jnp.dot(h2.astype(jnp.bfloat16), w3_ref[...],
                  preferred_element_type=jnp.float32) + b3_ref[...]
    out_ref[...] = out.astype(out_ref.dtype)


def _vmem_bytes(tb, D, weight_bufs):
    x_bytes = 2 * tb * D * 4                               # double-buffered f32 x tile
    w_bytes = weight_bufs * (D * _H1 * 2 + _H1 * _H2 * 2   # w1, w2 (bf16)
                             + _H2 * _LANE * 2             # w3 (256,1) lane-padded
                             + (_H1 + _H2 + _LANE) * 4)    # biases (b3 lane-padded)
    act_bytes = tb * (_H1 + _H2) * 4                       # h1 / h2 temporaries
    out_bytes = 2 * tb * _LANE * 4                         # (tb,1) out block, lane-padded
    return x_bytes + w_bytes + act_bytes + out_bytes


def _select_tile(B, D, max_tile_b, vmem_budget_bytes):
    """Near-equal, aligned, VMEM-aware batch tiles; >= 2 tiles when possible."""
    align = 128 if B >= 256 else 16
    Bp0 = _round_up(B, align)
    # VMEM-constrained tile cap (assume double-buffered weights for safety).
    fixed = _vmem_bytes(0, D, weight_bufs=2)
    per_row = 2 * D * 4 + (_H1 + _H2) * 4 + 2 * _LANE * 4
    avail = max(vmem_budget_bytes - fixed, per_row * align)
    # TODO(synk): for very large D (>= ~32k) add a K grid axis over D with an
    # f32 accumulator scratch instead of keeping all of w1 VMEM-resident.
    tb_cap = max(align, (avail // per_row) // align * align)
    tb_cap = min(tb_cap, max_tile_b)
    n = max(1, _cdiv(Bp0, tb_cap))
    if n == 1 and Bp0 >= 2 * align:
        n = 2                      # keep both v7x TensorCores busy / pipeline DMA
    tb = _round_up(_cdiv(Bp0, n), align)
    n = _cdiv(Bp0, tb)
    return tb, tb * n, n


def discriminator_forward(img, params, *, max_tile_b=1024,
                          vmem_budget_bytes=40 * 1024 * 1024):
    """img: (B, C, H, W) float.  Returns validity: (B, 1) float32."""
    w1, b1, w2, b2, w3, b3 = params
    B = img.shape[0]
    D = int(math.prod(img.shape[1:]))

    # Flatten only; the bf16 cast happens inside the kernel (no extra HBM pass).
    x = img.reshape(B, D).astype(jnp.float32)

    tb, Bp, n_tiles = _select_tile(B, D, max_tile_b, vmem_budget_bytes)
    if Bp != B:
        # Zero rows produce bias-only garbage that is sliced off below.
        x = jnp.pad(x, ((0, Bp - B), (0, 0)))

    # Weights cast / reshaped once; VMEM-resident across the whole grid.
    w1b = w1.astype(jnp.bfloat16)                       # (D, 512)
    w2b = w2.astype(jnp.bfloat16)                       # (512, 256)
    w3b = w3.reshape(_H2, 1).astype(jnp.bfloat16)       # (256, 1) column
    b1r = b1.reshape(1, _H1).astype(jnp.float32)
    b2r = b2.reshape(1, _H2).astype(jnp.float32)
    b3r = b3.reshape(1, 1).astype(jnp.float32)

    flops = 2 * Bp * (D * _H1 + _H1 * _H2 + _H2)
    bytes_accessed = (Bp * D * 4 + w1b.size * 2 + w2b.size * 2 + w3b.size * 2
                      + (b1r.size + b2r.size + b3r.size) * 4 + Bp * 4)

    def run(single_buffer_weights):
        if single_buffer_weights:
            def wspec(shape):
                return pl.BlockSpec(shape, lambda i: (0, 0),
                                    pipeline_mode=pl.Buffered(1))
            weight_bufs = 1
        else:
            def wspec(shape):
                return pl.BlockSpec(shape, lambda i: (0, 0))
            weight_bufs = 2
        vmem_limit = min(56 * 1024 * 1024,
                         max(32 * 1024 * 1024,
                             int(1.3 * _vmem_bytes(tb, D, weight_bufs))))
        return pl.pallas_call(
            _discriminator_kernel,
            out_shape=jax.ShapeDtypeStruct((Bp, 1), jnp.float32),
            grid_spec=pltpu.PrefetchScalarGridSpec(
                num_scalar_prefetch=0,
                grid=(n_tiles,),
                in_specs=[
                    pl.BlockSpec((tb, D), lambda i: (i, 0)),   # pipelined x tile
                    wspec(w1b.shape), wspec(b1r.shape),
                    wspec(w2b.shape), wspec(b2r.shape),
                    wspec(w3b.shape), wspec(b3r.shape),
                ],
                out_specs=pl.BlockSpec((tb, 1), lambda i: (i, 0)),
            ),
            compiler_params=pltpu.CompilerParams(
                dimension_semantics=("parallel",),             # megacore on v7x
                vmem_limit_bytes=vmem_limit),
            cost_estimate=pl.CostEstimate(flops=flops, transcendentals=0,
                                          bytes_accessed=int(bytes_accessed)),
        )(x, w1b, b1r, w2b, b2r, w3b, b3r)

    try:
        out = run(single_buffer_weights=True)
    except Exception:
        # pipeline_mode=pl.Buffered(1) unsupported on this jax build: fall back
        # to default double-buffered weight specs (correct, slightly more VMEM).
        out = run(single_buffer_weights=False)

    return out[:B]


def init_params(key, in_dim, dtype=jnp.float32):
    """PyTorch-style uniform(-1/sqrt(fan_in), 1/sqrt(fan_in)) init; weights
    stored as (in, out), i.e. already transposed for y = x @ W + b."""
    dims = [(in_dim, _H1), (_H1, _H2), (_H2, 1)]
    keys = jax.random.split(key, 2 * len(dims))
    params = []
    for li, (fan_in, fan_out) in enumerate(dims):
        bound = 1.0 / (fan_in ** 0.5)
        w = jax.random.uniform(keys[2 * li], (fan_in, fan_out),
                               minval=-bound, maxval=bound, dtype=dtype)
        b = jax.random.uniform(keys[2 * li + 1], (fan_out,),
                               minval=-bound, maxval=bound, dtype=dtype)
        params.extend([w, b])
    return tuple(params)


def reference_forward(img, params):
    """Pure-JAX f32 reference matching the PyTorch module."""
    w1, b1, w2, b2, w3, b3 = params
    x = img.reshape(img.shape[0], -1)
    h1 = x @ w1 + b1
    h1 = jnp.where(h1 > 0, h1, 0.2 * h1)
    h2 = h1 @ w2 + b2
    h2 = jnp.where(h2 > 0, h2, 0.2 * h2)
    return h2 @ w3 + b3


if __name__ == "__main__":
    key = jax.random.PRNGKey(0)
    k_img, k_par, k_big = jax.random.split(key, 3)

    # img_shape = (C, H, W) = (1, 16, 16) -> flattened dim 256
    B, C, H, W = 2, 1, 16, 16
    params = init_params(k_par, C * H * W)

    # Tiny-batch case (single 16-row tile).
    img = jax.random.normal(k_img, (B, C, H, W), dtype=jnp.float32)
    out = jax.block_until_ready(discriminator_forward(img, params))
    ref = reference_forward(img, params)
    assert out.shape == (B, 1), out.shape
    # bf16 matmul inputs with f32 accumulation -> loosened tolerance vs f32 ref.
    assert jnp.allclose(out, ref, atol=5e-2, rtol=5e-2), (out, ref)

    # Multi-tile ragged batch: B=384 -> 2 tiles of 256 rows (128 padded rows),
    # exercising the pipelined/parallel batch grid and the padding path.
    Bb = 384
    img_b = jax.random.normal(k_big, (Bb, C, H, W), dtype=jnp.float32)
    out_b = jax.block_until_ready(discriminator_forward(img_b, params))
    ref_b = reference_forward(img_b, params)
    assert out_b.shape == (Bb, 1), out_b.shape
    assert jnp.allclose(out_b, ref_b, atol=5e-2, rtol=5e-2), (
        float(jnp.max(jnp.abs(out_b - ref_b))))

    print("KERNEL_OK")
</pallas_src>

<mosaic_0001>
module attributes {stable_mosaic.version = 11 : i64} {
  func.func @_discriminator_kernel(%arg0: i32, %arg1: memref<16x256xf32, #tpu.memory_space<vmem>>, %arg2: memref<256x512xbf16, #tpu.memory_space<vmem>>, %arg3: memref<1x512xf32, #tpu.memory_space<vmem>>, %arg4: memref<512x256xbf16, #tpu.memory_space<vmem>>, %arg5: memref<1x256xf32, #tpu.memory_space<vmem>>, %arg6: memref<256x1xbf16, #tpu.memory_space<vmem>>, %arg7: memref<1x1xf32, #tpu.memory_space<vmem>>, %arg8: memref<16x1xf32, #tpu.memory_space<vmem>>) attributes {dimension_semantics = [#tpu.dimension_semantics<parallel>], iteration_bounds = array<i64: 1>, scalar_prefetch = 0 : i64, scratch_operands = 0 : i64, tpu.core_type = #tpu.core_type<tc>, window_params = [{transform_indices = @transform_0, window_bounds = array<i64: 16, 256>}, {pipeline_mode = #tpu.pipeline_mode<synchronous>, transform_indices = @transform_1, window_bounds = array<i64: 256, 512>}, {pipeline_mode = #tpu.pipeline_mode<synchronous>, transform_indices = @transform_2, window_bounds = array<i64: 1, 512>}, {pipeline_mode = #tpu.pipeline_mode<synchronous>, transform_indices = @transform_3, window_bounds = array<i64: 512, 256>}, {pipeline_mode = #tpu.pipeline_mode<synchronous>, transform_indices = @transform_4, window_bounds = array<i64: 1, 256>}, {pipeline_mode = #tpu.pipeline_mode<synchronous>, transform_indices = @transform_5, window_bounds = array<i64: 256, 1>}, {pipeline_mode = #tpu.pipeline_mode<synchronous>, transform_indices = @transform_6, window_bounds = array<i64: 1, 1>}, {transform_indices = @transform_7, window_bounds = array<i64: 16, 1>}]} {
    %c0 = arith.constant 0 : index
    %c0_0 = arith.constant 0 : index
    %0 = vector.load %arg1[%c0, %c0_0] : memref<16x256xf32, #tpu.memory_space<vmem>>, vector<16x256xf32>
    %1 = arith.truncf %0 : vector<16x256xf32> to vector<16x256xbf16>
    %c0_1 = arith.constant 0 : index
    %c0_2 = arith.constant 0 : index
    %2 = vector.load %arg2[%c0_1, %c0_2] : memref<256x512xbf16, #tpu.memory_space<vmem>>, vector<256x512xbf16>
    %cst = arith.constant dense<0.000000e+00> : vector<16x512xf32>
    %3 = tpu.matmul %1, %2, %cst {dimension_numbers = #tpu.dot_dimension_numbers<[1], [0], [0], [1], [0, 0, 1, 1], [], []>} : vector<16x256xbf16>, vector<256x512xbf16>, vector<16x512xf32> -> vector<16x512xf32>
    %c0_3 = arith.constant 0 : index
    %c0_4 = arith.constant 0 : index
    %4 = vector.load %arg3[%c0_3, %c0_4] : memref<1x512xf32, #tpu.memory_space<vmem>>, vector<1x512xf32>
    %5 = vector.broadcast %4 : vector<1x512xf32> to vector<16x512xf32>
    %6 = arith.addf %3, %5 : vector<16x512xf32>
    %cst_5 = arith.constant 2.000000e-01 : f32
    %7 = vector.broadcast %cst_5 : f32 to vector<16x512xf32>
    %8 = arith.mulf %7, %6 : vector<16x512xf32>
    %9 = arith.maximumf %6, %8 : vector<16x512xf32>
    %10 = arith.truncf %9 : vector<16x512xf32> to vector<16x512xbf16>
    %c0_6 = arith.constant 0 : index
    %c0_7 = arith.constant 0 : index
    %11 = vector.load %arg4[%c0_6, %c0_7] : memref<512x256xbf16, #tpu.memory_space<vmem>>, vector<512x256xbf16>
    %cst_8 = arith.constant dense<0.000000e+00> : vector<16x256xf32>
    %12 = tpu.matmul %10, %11, %cst_8 {dimension_numbers = #tpu.dot_dimension_numbers<[1], [0], [0], [1], [0, 0, 1, 1], [], []>} : vector<16x512xbf16>, vector<512x256xbf16>, vector<16x256xf32> -> vector<16x256xf32>
    %c0_9 = arith.constant 0 : index
    %c0_10 = arith.constant 0 : index
    %13 = vector.load %arg5[%c0_9, %c0_10] : memref<1x256xf32, #tpu.memory_space<vmem>>, vector<1x256xf32>
    %14 = vector.broadcast %13 : vector<1x256xf32> to vector<16x256xf32>
    %15 = arith.addf %12, %14 : vector<16x256xf32>
    %cst_11 = arith.constant 2.000000e-01 : f32
    %16 = vector.broadcast %cst_11 : f32 to vector<16x256xf32>
    %17 = arith.mulf %16, %15 : vector<16x256xf32>
    %18 = arith.maximumf %15, %17 : vector<16x256xf32>
    %19 = arith.truncf %18 : vector<16x256xf32> to vector<16x256xbf16>
    %c0_12 = arith.constant 0 : index
    %c0_13 = arith.constant 0 : index
    %20 = vector.load %arg6[%c0_12, %c0_13] : memref<256x1xbf16, #tpu.memory_space<vmem>>, vector<256x1xbf16>
    %cst_14 = arith.constant dense<0.000000e+00> : vector<16x1xf32>
    %21 = tpu.matmul %19, %20, %cst_14 {dimension_numbers = #tpu.dot_dimension_numbers<[1], [0], [0], [1], [0, 0, 1, 1], [], []>} : vector<16x256xbf16>, vector<256x1xbf16>, vector<16x1xf32> -> vector<16x1xf32>
    %c0_15 = arith.constant 0 : index
    %c0_16 = arith.constant 0 : index
    %22 = vector.load %arg7[%c0_15, %c0_16] : memref<1x1xf32, #tpu.memory_space<vmem>>, vector<1x1xf32>
    %23 = vector.broadcast %22 : vector<1x1xf32> to vector<16x1xf32>
    %24 = arith.addf %21, %23 : vector<16x1xf32>
    %c0_17 = arith.constant 0 : index
    %c0_18 = arith.constant 0 : index
    %25 = vector.load %arg8[%c0_17, %c0_18] : memref<16x1xf32, #tpu.memory_space<vmem>>, vector<16x1xf32>
    tpu.vector_store %arg8[%c0_17, %c0_18], %24 {strides = array<i32>} : memref<16x1xf32, #tpu.memory_space<vmem>>, vector<16x1xf32>,
    return
  }
  func.func @transform_0(%arg0: i32) -> (i32, i32) {
    %c0_i32 = arith.constant 0 : i32
    %c0_i32_0 = arith.constant 0 : i32
    return %arg0, %c0_i32 : i32, i32
  }
  func.func @transform_1(%arg0: i32) -> (i32, i32) {
    %c0_i32 = arith.constant 0 : i32
    %c0_i32_0 = arith.constant 0 : i32
    %c0_i32_1 = arith.constant 0 : i32
    return %c0_i32, %c0_i32_0 : i32, i32
  }
  func.func @transform_2(%arg0: i32) -> (i32, i32) {
    %c0_i32 = arith.constant 0 : i32
    %c0_i32_0 = arith.constant 0 : i32
    %c0_i32_1 = arith.constant 0 : i32
    return %c0_i32, %c0_i32_0 : i32, i32
  }
  func.func @transform_3(%arg0: i32) -> (i32, i32) {
    %c0_i32 = arith.constant 0 : i32
    %c0_i32_0 = arith.constant 0 : i32
    %c0_i32_1 = arith.constant 0 : i32
    return %c0_i32, %c0_i32_0 : i32, i32
  }
  func.func @transform_4(%arg0: i32) -> (i32, i32) {
    %c0_i32 = arith.constant 0 : i32
    %c0_i32_0 = arith.constant 0 : i32
    %c0_i32_1 = arith.constant 0 : i32
    return %c0_i32, %c0_i32_0 : i32, i32
  }
  func.func @transform_5(%arg0: i32) -> (i32, i32) {
    %c0_i32 = arith.constant 0 : i32
    %c0_i32_0 = arith.constant 0 : i32
    %c0_i32_1 = arith.constant 0 : i32
    return %c0_i32, %c0_i32_0 : i32, i32
  }
  func.func @transform_6(%arg0: i32) -> (i32, i32) {
    %c0_i32 = arith.constant 0 : i32
    %c0_i32_0 = arith.constant 0 : i32
    %c0_i32_1 = arith.constant 0 : i32
    return %c0_i32, %c0_i32_0 : i32, i32
  }
  func.func @transform_7(%arg0: i32) -> (i32, i32) {
    %c0_i32 = arith.constant 0 : i32
    %c0_i32_0 = arith.constant 0 : i32
    return %arg0, %c0_i32 : i32, i32
  }
}

module attributes {stable_mosaic.version = 11 : i64} {
  func.func @_discriminator_kernel(%arg0: i32, %arg1: memref<16x256xf32, #tpu.memory_space<vmem>>, %arg2: memref<256x512xbf16, #tpu.memory_space<vmem>>, %arg3: memref<1x512xf32, #tpu.memory_space<vmem>>, %arg4: memref<512x256xbf16, #tpu.memory_space<vmem>>, %arg5: memref<1x256xf32, #tpu.memory_space<vmem>>, %arg6: memref<256x1xbf16, #tpu.memory_space<vmem>>, %arg7: memref<1x1xf32, #tpu.memory_space<vmem>>, %arg8: memref<16x1xf32, #tpu.memory_space<vmem>>) attributes {dimension_semantics = [#tpu.dimension_semantics<parallel>], iteration_bounds = array<i64: 1>, scalar_prefetch = 0 : i64, scratch_operands = 0 : i64, tpu.core_type = #tpu.core_type<tc>, window_params = [{transform_indices = @transform_0, window_bounds = array<i64: 16, 256>}, {pipeline_mode = #tpu.pipeline_mode<synchronous>, transform_indices = @transform_1, window_bounds = array<i64: 256, 512>}, {pipeline_mode = #tpu.pipeline_mode<synchronous>, transform_indices = @transform_2, window_bounds = array<i64: 1, 512>}, {pipeline_mode = #tpu.pipeline_mode<synchronous>, transform_indices = @transform_3, window_bounds = array<i64: 512, 256>}, {pipeline_mode = #tpu.pipeline_mode<synchronous>, transform_indices = @transform_4, window_bounds = array<i64: 1, 256>}, {pipeline_mode = #tpu.pipeline_mode<synchronous>, transform_indices = @transform_5, window_bounds = array<i64: 256, 1>}, {pipeline_mode = #tpu.pipeline_mode<synchronous>, transform_indices = @transform_6, window_bounds = array<i64: 1, 1>}, {transform_indices = @transform_7, window_bounds = array<i64: 16, 1>}]} {
    %c0 = arith.constant 0 : index
    %c0_0 = arith.constant 0 : index
    %0 = vector.load %arg1[%c0, %c0_0] : memref<16x256xf32, #tpu.memory_space<vmem>>, vector<16x256xf32>
    %1 = arith.truncf %0 : vector<16x256xf32> to vector<16x256xbf16>
    %c0_1 = arith.constant 0 : index
    %c0_2 = arith.constant 0 : index
    %2 = vector.load %arg2[%c0_1, %c0_2] : memref<256x512xbf16, #tpu.memory_space<vmem>>, vector<256x512xbf16>
    %cst = arith.constant dense<0.000000e+00> : vector<16x512xf32>
    %3 = tpu.matmul %1, %2, %cst {dimension_numbers = #tpu.dot_dimension_numbers<[1], [0], [0], [1], [0, 0, 1, 1], [], []>} : vector<16x256xbf16>, vector<256x512xbf16>, vector<16x512xf32> -> vector<16x512xf32>
    %c0_3 = arith.constant 0 : index
    %c0_4 = arith.constant 0 : index
    %4 = vector.load %arg3[%c0_3, %c0_4] : memref<1x512xf32, #tpu.memory_space<vmem>>, vector<1x512xf32>
    %5 = vector.broadcast %4 : vector<1x512xf32> to vector<16x512xf32>
    %6 = arith.addf %3, %5 : vector<16x512xf32>
    %cst_5 = arith.constant 2.000000e-01 : f32
    %7 = vector.broadcast %cst_5 : f32 to vector<16x512xf32>
    %8 = arith.mulf %7, %6 : vector<16x512xf32>
    %9 = arith.maximumf %6, %8 : vector<16x512xf32>
    %10 = arith.truncf %9 : vector<16x512xf32> to vector<16x512xbf16>
    %c0_6 = arith.constant 0 : index
    %c0_7 = arith.constant 0 : index
    %11 = vector.load %arg4[%c0_6, %c0_7] : memref<512x256xbf16, #tpu.memory_space<vmem>>, vector<512x256xbf16>
    %cst_8 = arith.constant dense<0.000000e+00> : vector<16x256xf32>
    %12 = tpu.matmul %10, %11, %cst_8 {dimension_numbers = #tpu.dot_dimension_numbers<[1], [0], [0], [1], [0, 0, 1, 1], [], []>} : vector<16x512xbf16>, vector<512x256xbf16>, vector<16x256xf32> -> vector<16x256xf32>
    %c0_9 = arith.constant 0 : index
    %c0_10 = arith.constant 0 : index
    %13 = vector.load %arg5[%c0_9, %c0_10] : memref<1x256xf32, #tpu.memory_space<vmem>>, vector<1x256xf32>
    %14 = vector.broadcast %13 : vector<1x256xf32> to vector<16x256xf32>
    %15 = arith.addf %12, %14 : vector<16x256xf32>
    %cst_11 = arith.constant 2.000000e-01 : f32
    %16 = vector.broadcast %cst_11 : f32 to vector<16x256xf32>
    %17 = arith.mulf %16, %15 : vector<16x256xf32>
    %18 = arith.maximumf %15, %17 : vector<16x256xf32>
    %19 = arith.truncf %18 : vector<16x256xf32> to vector<16x256xbf16>
    %c0_12 = arith.constant 0 : index
    %c0_13 = arith.constant 0 : index
    %20 = vector.load %arg6[%c0_12, %c0_13] : memref<256x1xbf16, #tpu.memory_space<vmem>>, vector<256x1xbf16>
    %cst_14 = arith.constant dense<0.000000e+00> : vector<16x1xf32>
    %21 = tpu.matmul %19, %20, %cst_14 {dimension_numbers = #tpu.dot_dimension_numbers<[1], [0], [0], [1], [0, 0, 1, 1], [], []>} : vector<16x256xbf16>, vector<256x1xbf16>, vector<16x1xf32> -> vector<16x1xf32>
    %c0_15 = arith.constant 0 : index
    %c0_16 = arith.constant 0 : index
    %22 = vector.load %arg7[%c0_15, %c0_16] : memref<1x1xf32, #tpu.memory_space<vmem>>, vector<1x1xf32>
    %23 = vector.broadcast %22 : vector<1x1xf32> to vector<16x1xf32>
    %24 = arith.addf %21, %23 : vector<16x1xf32>
    %c0_17 = arith.constant 0 : index
    %c0_18 = arith.constant 0 : index
    %25 = vector.load %arg8[%c0_17, %c0_18] : memref<16x1xf32, #tpu.memory_space<vmem>>, vector<16x1xf32>
    tpu.vector_store %arg8[%c0_17, %c0_18], %24 {strides = array<i32>} : memref<16x1xf32, #tpu.memory_space<vmem>>, vector<16x1xf32>,
    return
  }
  func.func @transform_0(%arg0: i32) -> (i32, i32) {
    %c0_i32 = arith.constant 0 : i32
    %c0_i32_0 = arith.constant 0 : i32
    return %arg0, %c0_i32 : i32, i32
  }
  func.func @transform_1(%arg0: i32) -> (i32, i32) {
    %c0_i32 = arith.constant 0 : i32
    %c0_i32_0 = arith.constant 0 : i32
    %c0_i32_1 = arith.constant 0 : i32
    return %c0_i32, %c0_i32_0 : i32, i32
  }
  func.func @transform_2(%arg0: i32) -> (i32, i32) {
    %c0_i32 = arith.constant 0 : i32
    %c0_i32_0 = arith.constant 0 : i32
    %c0_i32_1 = arith.constant 0 : i32
    return %c0_i32, %c0_i32_0 : i32, i32
  }
  func.func @transform_3(%arg0: i32) -> (i32, i32) {
    %c0_i32 = arith.constant 0 : i32
    %c0_i32_0 = arith.constant 0 : i32
    %c0_i32_1 = arith.constant 0 : i32
    return %c0_i32, %c0_i32_0 : i32, i32
  }
  func.func @transform_4(%arg0: i32) -> (i32, i32) {
    %c0_i32 = arith.constant 0 : i32
    %c0_i32_0 = arith.constant 0 : i32
    %c0_i32_1 = arith.constant 0 : i32
    return %c0_i32, %c0_i32_0 : i32, i32
  }
  func.func @transform_5(%arg0: i32) -> (i32, i32) {
    %c0_i32 = arith.constant 0 : i32
    %c0_i32_0 = arith.constant 0 : i32
    %c0_i32_1 = arith.constant 0 : i32
    return %c0_i32, %c0_i32_0 : i32, i32
  }
  func.func @transform_6(%arg0: i32) -> (i32, i32) {
    %c0_i32 = arith.constant 0 : i32
    %c0_i32_0 = arith.constant 0 : i32
    %c0_i32_1 = arith.constant 0 : i32
    return %c0_i32, %c0_i32_0 : i32, i32
  }
  func.func @transform_7(%arg0: i32) -> (i32, i32) {
    %c0_i32 = arith.constant 0 : i32
    %c0_i32_0 = arith.constant 0 : i32
    return %arg0, %c0_i32 : i32, i32
  }
}

</mosaic_0001>

<llo_original>
// kernel: tpu_custom_call.1
$region0: #{tpu_custom_call.1}
  #allocation0 [shape = 'u32[]', space=smem, size = 0x4, offset = 0x4, fixed_abs, tag = 'smem constant byte address 0x4 - core index']
  #allocation1 [shape = 'u32[144,128]{1,0:T(1,128)}', space=vmem, size = 0x12000, scoped, tag = 'internal scratch']
  #allocation2 [shape = 'f32[1,1]{1,0:T(1,128)S(1)}', space=vmem, size = 0x200, scoped, tag = 'scoped memory for tpu_custom_call.1']
  %s0 = inlined_call_operand.vmem [shape: f32[16,256], index: 0, kind: input, shape index: {}]
  %s1 = inlined_call_operand.hbm [shape: bf16[256,512], index: 1, kind: input, shape index: {}]
  %s2 = inlined_call_operand.vmem [shape: f32[1,512], index: 2, kind: input, shape index: {}]
  %s3 = inlined_call_operand.hbm [shape: bf16[512,256], index: 3, kind: input, shape index: {}]
  %s4 = inlined_call_operand.vmem [shape: f32[1,256], index: 4, kind: input, shape index: {}]
  %s5 = inlined_call_operand.vmem [shape: bf16[256,1], index: 5, kind: input, shape index: {}]
  %s6 = inlined_call_operand.<no memory space> [shape: f32[1,1], index: 6, kind: input, shape index: {}]
  %s7 = inlined_call_operand.vmem [shape: f32[16,1], index: 7, kind: output, shape index: {}]
  %s8 = sld [smem:[#allocation0]]
  $region46: #{tpu_custom_call.1} parent=0
    _
  %s10 = ssub.s32 1, %s8
  %s11 = scalar_select 0, %s10, %s8
  %v12 = vstv %s6
  %13 = vst [vmem:[#allocation2] sm:$0x1] %v12
  $region1: #{tpu_custom_call.1} parent=0
    #allocation3 [shape = 'u8[262144]{0}', space=vmem, size = 0x40000, scoped, tag = 'input window, operand 1, single buffered']
    #allocation4 [shape = 's32[1]{0}', space=sflag, size = 0x4, scoped, tag = 'scoped memory for tpu_custom_call.1']
    #allocation5 [shape = 'u8[262144]{0}', space=vmem, size = 0x40000, scoped, tag = 'input window, operand 3, single buffered']
    #allocation6 [shape = 's32[1]{0}', space=sflag, size = 0x4, scoped, tag = 'scoped memory for tpu_custom_call.1']
    %14 = vsyncpa [#allocation4], 0
    %15 = vsyncpa [#allocation6], 0
    // Predicated region
    $region2: #{tpu_custom_call.1} parent=1 // pred_check
      _
    $region3: #{tpu_custom_call.1} parent=1 // pred_check_branch
      %17 = sbr.rel (0) target = $region5
    $region4: #{tpu_custom_call.1} parent=1 // pred_region
      _
    $region5: #{tpu_custom_call.1} parent=1 // pred_fallthru
      _
    // Predicated region
    $region6: #{tpu_custom_call.1} parent=1 // pred_check
      _
    $region7: #{tpu_custom_call.1} parent=1 // pred_check_branch
      %19 = sbr.rel (0) target = $region9
    $region8: #{tpu_custom_call.1} parent=1 // pred_region
      %s21 = ssub.s32 8192, 8192
      %22 = vsyncadd [#allocation4], %s21
      %s23 = sshll.u32 [#allocation3], 4
      %s24 = int_to_ptr.vmem [resolvable:$true] %s23
      %29 = dma.hbm_to_vmem [thread:$0]  %s1, 8192, %s24, [#allocation4], 256, 256, 16
    $region9: #{tpu_custom_call.1} parent=1 // pred_fallthru
      _
    // Predicated region
    $region10: #{tpu_custom_call.1} parent=1 // pred_check
      _
    $region11: #{tpu_custom_call.1} parent=1 // pred_check_branch
      %31 = sbr.rel (0) target = $region13
    $region12: #{tpu_custom_call.1} parent=1 // pred_region
      _
    $region13: #{tpu_custom_call.1} parent=1 // pred_fallthru
      _
    // Predicated region
    $region14: #{tpu_custom_call.1} parent=1 // pred_check
      _
    $region15: #{tpu_custom_call.1} parent=1 // pred_check_branch
      %33 = sbr.rel (0) target = $region17
    $region16: #{tpu_custom_call.1} parent=1 // pred_region
      %s35 = ssub.s32 8192, 8192
      %36 = vsyncadd [#allocation6], %s35
      %s37 = sshll.u32 [#allocation5], 4
      %s38 = int_to_ptr.vmem [resolvable:$true] %s37
      %43 = dma.hbm_to_vmem [thread:$0]  %s3, 8192, %s38, [#allocation6], 128, 128, 8
    $region17: #{tpu_custom_call.1} parent=1 // pred_fallthru
      _
    // Predicated region
    $region18: #{tpu_custom_call.1} parent=1 // pred_check
      _
    $region19: #{tpu_custom_call.1} parent=1 // pred_check_branch
      %45 = sbr.rel (0) target = $region21
    $region20: #{tpu_custom_call.1} parent=1 // pred_region
      _
    $region21: #{tpu_custom_call.1} parent=1 // pred_fallthru
      _
    // Predicated region
    $region22: #{tpu_custom_call.1} parent=1 // pred_check
      _
    $region23: #{tpu_custom_call.1} parent=1 // pred_check_branch
      %47 = sbr.rel (0) target = $region25
    $region24: #{tpu_custom_call.1} parent=1 // pred_region
      _
    $region25: #{tpu_custom_call.1} parent=1 // pred_fallthru
      _
    // Predicated region
    $region26: #{tpu_custom_call.1} parent=1 // pred_check
      _
    $region27: #{tpu_custom_call.1} parent=1 // pred_check_branch
      %49 = sbr.rel (0) target = $region29
    $region28: #{tpu_custom_call.1} parent=1 // pred_region
      _
    $region29: #{tpu_custom_call.1} parent=1 // pred_fallthru
      _
    // Predicated region
    $region30: #{tpu_custom_call.1} parent=1 // pred_check
      _
    $region31: #{tpu_custom_call.1} parent=1 // pred_check_branch
      %51 = sbr.rel (0) target = $region33
    $region32: #{tpu_custom_call.1} parent=1 // pred_region
      %52 = dma.done [#allocation4], 8192
    $region33: #{tpu_custom_call.1} parent=1 // pred_fallthru
      _
    // Predicated region
    $region34: #{tpu_custom_call.1} parent=1 // pred_check
      _
    $region35: #{tpu_custom_call.1} parent=1 // pred_check_branch
      %54 = sbr.rel (0) target = $region37
    $region36: #{tpu_custom_call.1} parent=1 // pred_region
      %55 = dma.done [#allocation6], 8192
    $region37: #{tpu_custom_call.1} parent=1 // pred_fallthru
      _
    %v57 = vld [vmem:[%s0] sm:$0xff]
    %v58 = vld [vmem:[%s0 + $0x8] sm:$0xff]
    %v59 = vld [vmem:[%s0 + $0x10] sm:$0xff]
    %v60 = vld [vmem:[%s0 + $0x18] sm:$0xff]
    %v61 = vpack.c.bf16 %v59, %v57
    %v62 = vpack.c.bf16 %v60, %v58
    %v63 = vld [vmem:[#allocation3] sm:$0xff]
    %v64 = vld [vmem:[#allocation3 + $0x8] sm:$0xff]
    %v65 = vld [vmem:[#allocation3 + $0x10] sm:$0xff]
    %v66 = vld [vmem:[#allocation3 + $0x18] sm:$0xff]
    %v67 = vld [vmem:[#allocation3 + $0x20] sm:$0xff]
    %v68 = vld [vmem:[#allocation3 + $0x28] sm:$0xff]
    %v69 = vld [vmem:[#allocation3 + $0x30] sm:$0xff]
    %v70 = vld [vmem:[#allocation3 + $0x38] sm:$0xff]
    %v71 = vld [vmem:[#allocation3 + $0x40] sm:$0xff]
    %v72 = vld [vmem:[#allocation3 + $0x48] sm:$0xff]
    %v73 = vld [vmem:[#allocation3 + $0x50] sm:$0xff]
    %v74 = vld [vmem:[#allocation3 + $0x58] sm:$0xff]
    %v75 = vld [vmem:[#allocation3 + $0x60] sm:$0xff]
    %v76 = vld [vmem:[#allocation3 + $0x68] sm:$0xff]
    %v77 = vld [vmem:[#allocation3 + $0x70] sm:$0xff]
    %v78 = vld [vmem:[#allocation3 + $0x78] sm:$0xff]
    %v79 = vld [vmem:[#allocation3 + $0x80] sm:$0xff]
    %v80 = vld [vmem:[#allocation3 + $0x88] sm:$0xff]
    %v81 = vld [vmem:[#allocation3 + $0x90] sm:$0xff]
    %v82 = vld [vmem:[#allocation3 + $0x98] sm:$0xff]
    %v83 = vld [vmem:[#allocation3 + $0xa0] sm:$0xff]
    %v84 = vld [vmem:[#allocation3 + $0xa8] sm:$0xff]
    %v85 = vld [vmem:[#allocation3 + $0xb0] sm:$0xff]
    %v86 = vld [vmem:[#allocation3 + $0xb8] sm:$0xff]
    %v87 = vld [vmem:[#allocation3 + $0xc0] sm:$0xff]
    %v88 = vld [vmem:[#allocation3 + $0xc8] sm:$0xff]
    %v89 = vld [vmem:[#allocation3 + $0xd0] sm:$0xff]
    %v90 = vld [vmem:[#allocation3 + $0xd8] sm:$0xff]
    %v91 = vld [vmem:[#allocation3 + $0xe0] sm:$0xff]
    %v92 = vld [vmem:[#allocation3 + $0xe8] sm:$0xff]
    %v93 = vld [vmem:[#allocation3 + $0xf0] sm:$0xff]
    %v94 = vld [vmem:[#allocation3 + $0xf8] sm:$0xff]
    %v95 = vld [vmem:[#allocation3 + $0x100] sm:$0xff]
    %v96 = vld [vmem:[#allocation3 + $0x108] sm:$0xff]
    %v97 = vld [vmem:[#allocation3 + $0x110] sm:$0xff]
    %v98 = vld [vmem:[#allocation3 + $0x118] sm:$0xff]
    %v99 = vld [vmem:[#allocation3 + $0x120] sm:$0xff]
    %v100 = vld [vmem:[#allocation3 + $0x128] sm:$0xff]
    %v101 = vld [vmem:[#allocation3 + $0x130] sm:$0xff]
    %v102 = vld [vmem:[#allocation3 + $0x138] sm:$0xff]
    %v103 = vld [vmem:[#allocation3 + $0x140] sm:$0xff]
    %v104 = vld [vmem:[#allocation3 + $0x148] sm:$0xff]
    %v105 = vld [vmem:[#allocation3 + $0x150] sm:$0xff]
    %v106 = vld [vmem:[#allocation3 + $0x158] sm:$0xff]
    %v107 = vld [vmem:[#allocation3 + $0x160] sm:$0xff]
    %v108 = vld [vmem:[#allocation3 + $0x168] sm:$0xff]
    %v109 = vld [vmem:[#allocation3 + $0x170] sm:$0xff]
    %v110 = vld [vmem:[#allocation3 + $0x178] sm:$0xff]
    %v111 = vld [vmem:[#allocation3 + $0x180] sm:$0xff]
    %v112 = vld [vmem:[#allocation3 + $0x188] sm:$0xff]
    %v113 = vld [vmem:[#allocation3 + $0x190] sm:$0xff]
    %v114 = vld [vmem:[#allocation3 + $0x198] sm:$0xff]
    %v115 = vld [vmem:[#allocation3 + $0x1a0] sm:$0xff]
    %v116 = vld [vmem:[#allocation3 + $0x1a8] sm:$0xff]
    %v117 = vld [vmem:[#allocation3 + $0x1b0] sm:$0xff]
    %v118 = vld [vmem:[#allocation3 + $0x1b8] sm:$0xff]
    %v119 = vld [vmem:[#allocation3 + $0x1c0] sm:$0xff]
    %v120 = vld [vmem:[#allocation3 + $0x1c8] sm:$0xff]
    %v121 = vld [vmem:[#allocation3 + $0x1d0] sm:$0xff]
    %v122 = vld [vmem:[#allocation3 + $0x1d8] sm:$0xff]
    %v123 = vld [vmem:[#allocation3 + $0x1e0] sm:$0xff]
    %v124 = vld [vmem:[#allocation3 + $0x1e8] sm:$0xff]
    %v125 = vld [vmem:[#allocation3 + $0x1f0] sm:$0xff]
    %v126 = vld [vmem:[#allocation3 + $0x1f8] sm:$0xff]
    %v127 = vld [vmem:[%s2] sm:$0xf]
    %v129 = vlaneseq
    %v130 = vshrl.u32 %v129, 7
    %v131 = vsub.s32 0, %v130
    %v132 = vrot.slane %v127, %v131
    %v133 = vlaneseq
    %v134 = vshrl.u32 %v133, 7
    %v135 = vsub.s32 1, %v134
    %v136 = vrot.slane %v127, %v135
    %v137 = vlaneseq
    %v138 = vshrl.u32 %v137, 7
    %v139 = vsub.s32 2, %v138
    %v140 = vrot.slane %v127, %v139
    %v141 = vlaneseq
    %v142 = vshrl.u32 %v141, 7
    %v143 = vsub.s32 3, %v142
    %v144 = vrot.slane %v127, %v143
    %v213 = vunpack.c.l.b16 %v63
    %v214 = vunpack.c.h.b16 %v63
    %v215 = vunpack.c.l.b16 %v64
    %v216 = vunpack.c.h.b16 %v64
    %v217 = vunpack.c.l.b16 %v65
    %v218 = vunpack.c.h.b16 %v65
    %v219 = vunpack.c.l.b16 %v66
    %v220 = vunpack.c.h.b16 %v66
    %v221 = vunpack.c.l.b16 %v67
    %v222 = vunpack.c.h.b16 %v67
    %v223 = vunpack.c.l.b16 %v68
    %v224 = vunpack.c.h.b16 %v68
    %v225 = vunpack.c.l.b16 %v69
    %v226 = vunpack.c.h.b16 %v69
    %v227 = vunpack.c.l.b16 %v70
    %v228 = vunpack.c.h.b16 %v70
    %v229 = vunpack.c.l.b16 %v71
    %v230 = vunpack.c.h.b16 %v71
    %v231 = vunpack.c.l.b16 %v72
    %v232 = vunpack.c.h.b16 %v72
    %v233 = vunpack.c.l.b16 %v73
    %v234 = vunpack.c.h.b16 %v73
    %v235 = vunpack.c.l.b16 %v74
    %v236 = vunpack.c.h.b16 %v74
    %v237 = vunpack.c.l.b16 %v75
    %v238 = vunpack.c.h.b16 %v75
    %v239 = vunpack.c.l.b16 %v76
    %v240 = vunpack.c.h.b16 %v76
    %v241 = vunpack.c.l.b16 %v77
    %v242 = vunpack.c.h.b16 %v77
    %v243 = vunpack.c.l.b16 %v78
    %v244 = vunpack.c.h.b16 %v78
    %v245 = vunpack.c.l.b16 %v79
    %v246 = vunpack.c.h.b16 %v79
    %v247 = vunpack.c.l.b16 %v80
    %v248 = vunpack.c.h.b16 %v80
    %v249 = vunpack.c.l.b16 %v81
    %v250 = vunpack.c.h.b16 %v81
    %v251 = vunpack.c.l.b16 %v82
    %v252 = vunpack.c.h.b16 %v82
    %v253 = vunpack.c.l.b16 %v83
    %v254 = vunpack.c.h.b16 %v83
    %v255 = vunpack.c.l.b16 %v84
    %v256 = vunpack.c.h.b16 %v84
    %v257 = vunpack.c.l.b16 %v85
    %v258 = vunpack.c.h.b16 %v85
    %v259 = vunpack.c.l.b16 %v86
    %v260 = vunpack.c.h.b16 %v86
    %v261 = vunpack.c.l.b16 %v87
    %v262 = vunpack.c.h.b16 %v87
    %v263 = vunpack.c.l.b16 %v88
    %v264 = vunpack.c.h.b16 %v88
    %v265 = vunpack.c.l.b16 %v89
    %v266 = vunpack.c.h.b16 %v89
    %v267 = vunpack.c.l.b16 %v90
    %v268 = vunpack.c.h.b16 %v90
    %v269 = vunpack.c.l.b16 %v91
    %v270 = vunpack.c.h.b16 %v91
    %v271 = vunpack.c.l.b16 %v92
    %v272 = vunpack.c.h.b16 %v92
    %v273 = vunpack.c.l.b16 %v93
    %v274 = vunpack.c.h.b16 %v93
    %v275 = vunpack.c.l.b16 %v94
    %v276 = vunpack.c.h.b16 %v94
    %v277 = vunpack.c.l.b16 %v95
    %v278 = vunpack.c.h.b16 %v95
    %v279 = vunpack.c.l.b16 %v96
    %v280 = vunpack.c.h.b16 %v96
    %v281 = vunpack.c.l.b16 %v97
    %v282 = vunpack.c.h.b16 %v97
    %v283 = vunpack.c.l.b16 %v98
    %v284 = vunpack.c.h.b16 %v98
    %v285 = vunpack.c.l.b16 %v99
    %v286 = vunpack.c.h.b16 %v99
    %v287 = vunpack.c.l.b16 %v100
    %v288 = vunpack.c.h.b16 %v100
    %v289 = vunpack.c.l.b16 %v101
    %v290 = vunpack.c.h.b16 %v101
    %v291 = vunpack.c.l.b16 %v102
    %v292 = vunpack.c.h.b16 %v102
    %v293 = vunpack.c.l.b16 %v103
    %v294 = vunpack.c.h.b16 %v103
    %v295 = vunpack.c.l.b16 %v104
    %v296 = vunpack.c.h.b16 %v104
    %v297 = vunpack.c.l.b16 %v105
    %v298 = vunpack.c.h.b16 %v105
    %v299 = vunpack.c.l.b16 %v106
    %v300 = vunpack.c.h.b16 %v106
    %v301 = vunpack.c.l.b16 %v107
    %v302 = vunpack.c.h.b16 %v107
    %v303 = vunpack.c.l.b16 %v108
    %v304 = vunpack.c.h.b16 %v108
    %v305 = vunpack.c.l.b16 %v109
    %v306 = vunpack.c.h.b16 %v109
    %v307 = vunpack.c.l.b16 %v110
    %v308 = vunpack.c.h.b16 %v110
    %v309 = vunpack.c.l.b16 %v111
    %v310 = vunpack.c.h.b16 %v111
    %v311 = vunpack.c.l.b16 %v112
    %v312 = vunpack.c.h.b16 %v112
    %v313 = vunpack.c.l.b16 %v113
    %v314 = vunpack.c.h.b16 %v113
    %v315 = vunpack.c.l.b16 %v114
    %v316 = vunpack.c.h.b16 %v114
    %v317 = vunpack.c.l.b16 %v115
    %v318 = vunpack.c.h.b16 %v115
    %v319 = vunpack.c.l.b16 %v116
    %v320 = vunpack.c.h.b16 %v116
    %v321 = vunpack.c.l.b16 %v117
    %v322 = vunpack.c.h.b16 %v117
    %v323 = vunpack.c.l.b16 %v118
    %v324 = vunpack.c.h.b16 %v118
    %v325 = vunpack.c.l.b16 %v119
    %v326 = vunpack.c.h.b16 %v119
    %v327 = vunpack.c.l.b16 %v120
    %v328 = vunpack.c.h.b16 %v120
    %v329 = vunpack.c.l.b16 %v121
    %v330 = vunpack.c.h.b16 %v121
    %v331 = vunpack.c.l.b16 %v122
    %v332 = vunpack.c.h.b16 %v122
    %v333 = vunpack.c.l.b16 %v123
    %v334 = vunpack.c.h.b16 %v123
    %v335 = vunpack.c.l.b16 %v124
    %v336 = vunpack.c.h.b16 %v124
    %v337 = vunpack.c.l.b16 %v125
    %v338 = vunpack.c.h.b16 %v125
    %v339 = vunpack.c.l.b16 %v126
    %v340 = vunpack.c.h.b16 %v126
    %v341 = vpack.c.b16 %v217, %v213
    %v342 = vpack.c.b16 %v218, %v214
    %v343 = vpack.c.b16 %v219, %v215
    %v344 = vpack.c.b16 %v220, %v216
    %v345 = vpack.c.b16 %v225, %v221
    %v346 = vpack.c.b16 %v226, %v222
    %v347 = vpack.c.b16 %v227, %v223
    %v348 = vpack.c.b16 %v228, %v224
    %v349 = vpack.c.b16 %v233, %v229
    %v350 = vpack.c.b16 %v234, %v230
    %v351 = vpack.c.b16 %v235, %v231
    %v352 = vpack.c.b16 %v236, %v232
    %v353 = vpack.c.b16 %v241, %v237
    %v354 = vpack.c.b16 %v242, %v238
    %v355 = vpack.c.b16 %v243, %v239
    %v356 = vpack.c.b16 %v244, %v240
    %v357 = vpack.c.b16 %v249, %v245
    %v358 = vpack.c.b16 %v250, %v246
    %v359 = vpack.c.b16 %v251, %v247
    %v360 = vpack.c.b16 %v252, %v248
    %v361 = vpack.c.b16 %v257, %v253
    %v362 = vpack.c.b16 %v258, %v254
    %v363 = vpack.c.b16 %v259, %v255
    %v364 = vpack.c.b16 %v260, %v256
    %v365 = vpack.c.b16 %v265, %v261
    %v366 = vpack.c.b16 %v266, %v262
    %v367 = vpack.c.b16 %v267, %v263
    %v368 = vpack.c.b16 %v268, %v264
    %v369 = vpack.c.b16 %v273, %v269
    %v370 = vpack.c.b16 %v274, %v270
    %v371 = vpack.c.b16 %v275, %v271
    %v372 = vpack.c.b16 %v276, %v272
    %v373 = vpack.c.b16 %v281, %v277
    %v374 = vpack.c.b16 %v282, %v278
    %v375 = vpack.c.b16 %v283, %v279
    %v376 = vpack.c.b16 %v284, %v280
    %v377 = vpack.c.b16 %v289, %v285
    %v378 = vpack.c.b16 %v290, %v286
    %v379 = vpack.c.b16 %v291, %v287
    %v380 = vpack.c.b16 %v292, %v288
    %v381 = vpack.c.b16 %v297, %v293
    %v382 = vpack.c.b16 %v298, %v294
    %v383 = vpack.c.b16 %v299, %v295
    %v384 = vpack.c.b16 %v300, %v296
    %v385 = vpack.c.b16 %v305, %v301
    %v386 = vpack.c.b16 %v306, %v302
    %v387 = vpack.c.b16 %v307, %v303
    %v388 = vpack.c.b16 %v308, %v304
    %v389 = vpack.c.b16 %v313, %v309
    %v390 = vpack.c.b16 %v314, %v310
    %v391 = vpack.c.b16 %v315, %v311
    %v392 = vpack.c.b16 %v316, %v312
    %v393 = vpack.c.b16 %v321, %v317
    %v394 = vpack.c.b16 %v322, %v318
    %v395 = vpack.c.b16 %v323, %v319
    %v396 = vpack.c.b16 %v324, %v320
    %v397 = vpack.c.b16 %v329, %v325
    %v398 = vpack.c.b16 %v330, %v326
    %v399 = vpack.c.b16 %v331, %v327
    %v400 = vpack.c.b16 %v332, %v328
    %v401 = vpack.c.b16 %v337, %v333
    %v402 = vpack.c.b16 %v338, %v334
    %v403 = vpack.c.b16 %v339, %v335
    %v404 = vpack.c.b16 %v340, %v336
    %469 = vmatprep.subr.bf16.mxu0 %v342
    %470 = vmatpush1.bf16.msra.mxu0 %v341
    %471 = vmatprep.subr.bf16.mxu0 %v346
    %472 = vmatpush1.bf16.msra.mxu0 %v345
    %473 = vmatprep.subr.bf16.mxu0 %v350
    %474 = vmatpush1.bf16.msra.mxu0 %v349
    %475 = vmatprep.subr.bf16.mxu0 %v354
    %476 = vmatpush1.bf16.msra.mxu0 %v353
    %477 = vmatprep.subr.bf16.mxu0 %v358
    %478 = vmatpush1.bf16.msra.mxu0 %v357
    %479 = vmatprep.subr.bf16.mxu0 %v362
    %480 = vmatpush1.bf16.msra.mxu0 %v361
    %481 = vmatprep.subr.bf16.mxu0 %v366
    %482 = vmatpush1.bf16.msra.mxu0 %v365
    %483 = vmatprep.subr.bf16.mxu0 %v370
    %484 = vmatpush1.bf16.msra.mxu0 %v369
    %485 = vmatprep.subr.bf16.mxu0 %v374
    %486 = vmatpush1.bf16.msra.mxu0 %v373
    %487 = vmatprep.subr.bf16.mxu0 %v378
    %488 = vmatpush1.bf16.msra.mxu0 %v377
    %489 = vmatprep.subr.bf16.mxu0 %v382
    %490 = vmatpush1.bf16.msra.mxu0 %v381
    %491 = vmatprep.subr.bf16.mxu0 %v386
    %492 = vmatpush1.bf16.msra.mxu0 %v385
    %493 = vmatprep.subr.bf16.mxu0 %v390
    %494 = vmatpush1.bf16.msra.mxu0 %v389
    %495 = vmatprep.subr.bf16.mxu0 %v394
    %496 = vmatpush1.bf16.msra.mxu0 %v393
    %497 = vmatprep.subr.bf16.mxu0 %v398
    %498 = vmatpush1.bf16.msra.mxu0 %v397
    %499 = vmatprep.subr.bf16.mxu0 %v402
    %500 = vmatpush1.bf16.msra.mxu0 %v401
    %501 = vmatprep.mubr.bf16.mxu0 %v62
    %502 = vmatmul.mubr.bf16.gmra.mrb[0].mxu0 %v61
    %v503 = vpop.f32.mrb[0].mxu0
    %v504 = vadd.f32 %v132, %v503
    %v505 = vpop.f32.mrb[0].mxu0
    %v506 = vadd.f32 %v136, %v505
    %v507 = vpop.f32.mrb[0].mxu0
    %v508 = vadd.f32 %v132, %v507
    %v509 = vpop.f32.mrb[0].mxu0
    %v510 = vadd.f32 %v136, %v509
    %511 = vdwg.mxu0
    %512 = vmatprep.subr.bf16.mxu0 %v344
    %513 = vmatpush1.bf16.msra.mxu0 %v343
    %514 = vmatprep.subr.bf16.mxu0 %v348
    %515 = vmatpush1.bf16.msra.mxu0 %v347
    %516 = vmatprep.subr.bf16.mxu0 %v352
    %517 = vmatpush1.bf16.msra.mxu0 %v351
    %518 = vmatprep.subr.bf16.mxu0 %v356
    %519 = vmatpush1.bf16.msra.mxu0 %v355
    %520 = vmatprep.subr.bf16.mxu0 %v360
    %521 = vmatpush1.bf16.msra.mxu0 %v359
    %522 = vmatprep.subr.bf16.mxu0 %v364
    %523 = vmatpush1.bf16.msra.mxu0 %v363
    %524 = vmatprep.subr.bf16.mxu0 %v368
    %525 = vmatpush1.bf16.msra.mxu0 %v367
    %526 = vmatprep.subr.bf16.mxu0 %v372
    %527 = vmatpush1.bf16.msra.mxu0 %v371
    %528 = vmatprep.subr.bf16.mxu0 %v376
    %529 = vmatpush1.bf16.msra.mxu0 %v375
    %530 = vmatprep.subr.bf16.mxu0 %v380
    %531 = vmatpush1.bf16.msra.mxu0 %v379
    %532 = vmatprep.subr.bf16.mxu0 %v384
    %533 = vmatpush1.bf16.msra.mxu0 %v383
    %534 = vmatprep.subr.bf16.mxu0 %v388
    %535 = vmatpush1.bf16.msra.mxu0 %v387
    %536 = vmatprep.subr.bf16.mxu0 %v392
    %537 = vmatpush1.bf16.msra.mxu0 %v391
    %538 = vmatprep.subr.bf16.mxu0 %v396
    %539 = vmatpush1.bf16.msra.mxu0 %v395
    %540 = vmatprep.subr.bf16.mxu0 %v400
    %541 = vmatpush1.bf16.msra.mxu0 %v399
    %542 = vmatprep.subr.bf16.mxu0 %v404
    %543 = vmatpush1.bf16.msra.mxu0 %v403
    %544 = vmatprep.mubr.bf16.mxu0 %v62
    %545 = vmatmul.mubr.bf16.gmra.mrb[0].mxu0 %v61
    %v546 = vpop.f32.mrb[0].mxu0
    %v547 = vadd.f32 %v140, %v546
    %v548 = vpop.f32.mrb[0].mxu0
    %v549 = vadd.f32 %v144, %v548
    %v550 = vpop.f32.mrb[0].mxu0
    %v551 = vadd.f32 %v140, %v550
    %v552 = vpop.f32.mrb[0].mxu0
    %v553 = vadd.f32 %v144, %v552
    %554 = vdwg.mxu0
    %v555 = vmul.f32 %v504, 0.2
    %v556 = vmul.f32 %v506, 0.2
    %v557 = vmul.f32 %v547, 0.2
    %v558 = vmul.f32 %v549, 0.2
    %v559 = vmul.f32 %v508, 0.2
    %v560 = vmul.f32 %v510, 0.2
    %v561 = vmul.f32 %v551, 0.2
    %v562 = vmul.f32 %v553, 0.2
    %v563 = vmax.f32 %v504, %v555
    %v564 = vmax.f32 %v506, %v556
    %v565 = vmax.f32 %v547, %v557
    %v566 = vmax.f32 %v549, %v558
    %v567 = vmax.f32 %v508, %v559
    %v568 = vmax.f32 %v510, %v560
    %v569 = vmax.f32 %v551, %v561
    %v570 = vmax.f32 %v553, %v562
    %v571 = vpack.c.bf16 %v567, %v563
    %v572 = vpack.c.bf16 %v568, %v564
    %v573 = vpack.c.bf16 %v569, %v565
    %v574 = vpack.c.bf16 %v570, %v566
    %v575 = vld [vmem:[#allocation5] sm:$0xff]
    %v576 = vld [vmem:[#allocation5 + $0x8] sm:$0xff]
    %v577 = vld [vmem:[#allocation5 + $0x10] sm:$0xff]
    %v578 = vld [vmem:[#allocation5 + $0x18] sm:$0xff]
    %v579 = vld [vmem:[#allocation5 + $0x20] sm:$0xff]
    %v580 = vld [vmem:[#allocation5 + $0x28] sm:$0xff]
    %v581 = vld [vmem:[#allocation5 + $0x30] sm:$0xff]
    %v582 = vld [vmem:[#allocation5 + $0x38] sm:$0xff]
    %v583 = vld [vmem:[#allocation5 + $0x40] sm:$0xff]
    %v584 = vld [vmem:[#allocation5 + $0x48] sm:$0xff]
    %v585 = vld [vmem:[#allocation5 + $0x50] sm:$0xff]
    %v586 = vld [vmem:[#allocation5 + $0x58] sm:$0xff]
    %v587 = vld [vmem:[#allocation5 + $0x60] sm:$0xff]
    %v588 = vld [vmem:[#allocation5 + $0x68] sm:$0xff]
    %v589 = vld [vmem:[#allocation5 + $0x70] sm:$0xff]
    %v590 = vld [vmem:[#allocation5 + $0x78] sm:$0xff]
    %v591 = vld [vmem:[#allocation5 + $0x80] sm:$0xff]
    %v592 = vld [vmem:[#allocation5 + $0x88] sm:$0xff]
    %v593 = vld [vmem:[#allocation5 + $0x90] sm:$0xff]
    %v594 = vld [vmem:[#allocation5 + $0x98] sm:$0xff]
    %v595 = vld [vmem:[#allocation5 + $0xa0] sm:$0xff]
    %v596 = vld [vmem:[#allocation5 + $0xa8] sm:$0xff]
    %v597 = vld [vmem:[#allocation5 + $0xb0] sm:$0xff]
    %v598 = vld [vmem:[#allocation5 + $0xb8] sm:$0xff]
    %v599 = vld [vmem:[#allocation5 + $0xc0] sm:$0xff]
    %v600 = vld [vmem:[#allocation5 + $0xc8] sm:$0xff]
    %v601 = vld [vmem:[#allocation5 + $0xd0] sm:$0xff]
    %v602 = vld [vmem:[#allocation5 + $0xd8] sm:$0xff]
    %v603 = vld [vmem:[#allocation5 + $0xe0] sm:$0xff]
    %v604 = vld [vmem:[#allocation5 + $0xe8] sm:$0xff]
    %v605 = vld [vmem:[#allocation5 + $0xf0] sm:$0xff]
    %v606 = vld [vmem:[#allocation5 + $0xf8] sm:$0xff]
    %v607 = vld [vmem:[#allocation5 + $0x100] sm:$0xff]
    %v608 = vld [vmem:[#allocation5 + $0x108] sm:$0xff]
    %v609 = vld [vmem:[#allocation5 + $0x110] sm:$0xff]
    %v610 = vld [vmem:[#allocation5 + $0x118] sm:$0xff]
    %v611 = vld [vmem:[#allocation5 + $0x120] sm:$0xff]
    %v612 = vld [vmem:[#allocation5 + $0x128] sm:$0xff]
    %v613 = vld [vmem:[#allocation5 + $0x130] sm:$0xff]
    %v614 = vld [vmem:[#allocation5 + $0x138] sm:$0xff]
    %v615 = vld [vmem:[#allocation5 + $0x140] sm:$0xff]
    %v616 = vld [vmem:[#allocation5 + $0x148] sm:$0xff]
    %v617 = vld [vmem:[#allocation5 + $0x150] sm:$0xff]
    %v618 = vld [vmem:[#allocation5 + $0x158] sm:$0xff]
    %v619 = vld [vmem:[#allocation5 + $0x160] sm:$0xff]
    %v620 = vld [vmem:[#allocation5 + $0x168] sm:$0xff]
    %v621 = vld [vmem:[#allocation5 + $0x170] sm:$0xff]
    %v622 = vld [vmem:[#allocation5 + $0x178] sm:$0xff]
    %v623 = vld [vmem:[#allocation5 + $0x180] sm:$0xff]
    %v624 = vld [vmem:[#allocation5 + $0x188] sm:$0xff]
    %v625 = vld [vmem:[#allocation5 + $0x190] sm:$0xff]
    %v626 = vld [vmem:[#allocation5 + $0x198] sm:$0xff]
    %v627 = vld [vmem:[#allocation5 + $0x1a0] sm:$0xff]
    %v628 = vld [vmem:[#allocation5 + $0x1a8] sm:$0xff]
    %v629 = vld [vmem:[#allocation5 + $0x1b0] sm:$0xff]
    %v630 = vld [vmem:[#allocation5 + $0x1b8] sm:$0xff]
    %v631 = vld [vmem:[#allocation5 + $0x1c0] sm:$0xff]
    %v632 = vld [vmem:[#allocation5 + $0x1c8] sm:$0xff]
    %v633 = vld [vmem:[#allocation5 + $0x1d0] sm:$0xff]
    %v634 = vld [vmem:[#allocation5 + $0x1d8] sm:$0xff]
    %v635 = vld [vmem:[#allocation5 + $0x1e0] sm:$0xff]
    %v636 = vld [vmem:[#allocation5 + $0x1e8] sm:$0xff]
    %v637 = vld [vmem:[#allocation5 + $0x1f0] sm:$0xff]
    %v638 = vld [vmem:[#allocation5 + $0x1f8] sm:$0xff]
    %v639 = vld [vmem:[%s4] sm:$0x3]
    %v641 = vlaneseq
    %v642 = vshrl.u32 %v641, 7
    %v643 = vsub.s32 0, %v642
    %v644 = vrot.slane %v639, %v643
    %v645 = vlaneseq
    %v646 = vshrl.u32 %v645, 7
    %v647 = vsub.s32 1, %v646
    %v648 = vrot.slane %v639, %v647
    %v715 = vunpack.c.l.b16 %v575
    %v716 = vunpack.c.h.b16 %v575
    %v717 = vunpack.c.l.b16 %v576
    %v718 = vunpack.c.h.b16 %v576
    %v719 = vunpack.c.l.b16 %v577
    %v720 = vunpack.c.h.b16 %v577
    %v721 = vunpack.c.l.b16 %v578
    %v722 = vunpack.c.h.b16 %v578
    %v723 = vunpack.c.l.b16 %v579
    %v724 = vunpack.c.h.b16 %v579
    %v725 = vunpack.c.l.b16 %v580
    %v726 = vunpack.c.h.b16 %v580
    %v727 = vunpack.c.l.b16 %v581
    %v728 = vunpack.c.h.b16 %v581
    %v729 = vunpack.c.l.b16 %v582
    %v730 = vunpack.c.h.b16 %v582
    %v731 = vunpack.c.l.b16 %v583
    %v732 = vunpack.c.h.b16 %v583
    %v733 = vunpack.c.l.b16 %v584
    %v734 = vunpack.c.h.b16 %v584
    %v735 = vunpack.c.l.b16 %v585
    %v736 = vunpack.c.h.b16 %v585
    %v737 = vunpack.c.l.b16 %v586
    %v738 = vunpack.c.h.b16 %v586
    %v739 = vunpack.c.l.b16 %v587
    %v740 = vunpack.c.h.b16 %v587
    %v741 = vunpack.c.l.b16 %v588
    %v742 = vunpack.c.h.b16 %v588
    %v743 = vunpack.c.l.b16 %v589
    %v744 = vunpack.c.h.b16 %v589
    %v745 = vunpack.c.l.b16 %v590
    %v746 = vunpack.c.h.b16 %v590
    %v747 = vunpack.c.l.b16 %v591
    %v748 = vunpack.c.h.b16 %v591
    %v749 = vunpack.c.l.b16 %v592
    %v750 = vunpack.c.h.b16 %v592
    %v751 = vunpack.c.l.b16 %v593
    %v752 = vunpack.c.h.b16 %v593
    %v753 = vunpack.c.l.b16 %v594
    %v754 = vunpack.c.h.b16 %v594
    %v755 = vunpack.c.l.b16 %v595
    %v756 = vunpack.c.h.b16 %v595
    %v757 = vunpack.c.l.b16 %v596
    %v758 = vunpack.c.h.b16 %v596
    %v759 = vunpack.c.l.b16 %v597
    %v760 = vunpack.c.h.b16 %v597
    %v761 = vunpack.c.l.b16 %v598
    %v762 = vunpack.c.h.b16 %v598
    %v763 = vunpack.c.l.b16 %v599
    %v764 = vunpack.c.h.b16 %v599
    %v765 = vunpack.c.l.b16 %v600
    %v766 = vunpack.c.h.b16 %v600
    %v767 = vunpack.c.l.b16 %v601
    %v768 = vunpack.c.h.b16 %v601
    %v769 = vunpack.c.l.b16 %v602
    %v770 = vunpack.c.h.b16 %v602
    %v771 = vunpack.c.l.b16 %v603
    %v772 = vunpack.c.h.b16 %v603
    %v773 = vunpack.c.l.b16 %v604
    %v774 = vunpack.c.h.b16 %v604
    %v775 = vunpack.c.l.b16 %v605
    %v776 = vunpack.c.h.b16 %v605
    %v777 = vunpack.c.l.b16 %v606
    %v778 = vunpack.c.h.b16 %v606
    %v779 = vunpack.c.l.b16 %v607
    %v780 = vunpack.c.h.b16 %v607
    %v781 = vunpack.c.l.b16 %v608
    %v782 = vunpack.c.h.b16 %v608
    %v783 = vunpack.c.l.b16 %v609
    %v784 = vunpack.c.h.b16 %v609
    %v785 = vunpack.c.l.b16 %v610
    %v786 = vunpack.c.h.b16 %v610
    %v787 = vunpack.c.l.b16 %v611
    %v788 = vunpack.c.h.b16 %v611
    %v789 = vunpack.c.l.b16 %v612
    %v790 = vunpack.c.h.b16 %v612
    %v791 = vunpack.c.l.b16 %v613
    %v792 = vunpack.c.h.b16 %v613
    %v793 = vunpack.c.l.b16 %v614
    %v794 = vunpack.c.h.b16 %v614
    %v795 = vunpack.c.l.b16 %v615
    %v796 = vunpack.c.h.b16 %v615
    %v797 = vunpack.c.l.b16 %v616
    %v798 = vunpack.c.h.b16 %v616
    %v799 = vunpack.c.l.b16 %v617
    %v800 = vunpack.c.h.b16 %v617
    %v801 = vunpack.c.l.b16 %v618
    %v802 = vunpack.c.h.b16 %v618
    %v803 = vunpack.c.l.b16 %v619
    %v804 = vunpack.c.h.b16 %v619
    %v805 = vunpack.c.l.b16 %v620
    %v806 = vunpack.c.h.b16 %v620
    %v807 = vunpack.c.l.b16 %v621
    %v808 = vunpack.c.h.b16 %v621
    %v809 = vunpack.c.l.b16 %v622
    %v810 = vunpack.c.h.b16 %v622
    %v811 = vunpack.c.l.b16 %v623
    %v812 = vunpack.c.h.b16 %v623
    %v813 = vunpack.c.l.b16 %v624
    %v814 = vunpack.c.h.b16 %v624
    %v815 = vunpack.c.l.b16 %v625
    %v816 = vunpack.c.h.b16 %v625
    %v817 = vunpack.c.l.b16 %v626
    %v818 = vunpack.c.h.b16 %v626
    %v819 = vunpack.c.l.b16 %v627
    %v820 = vunpack.c.h.b16 %v627
    %v821 = vunpack.c.l.b16 %v628
    %v822 = vunpack.c.h.b16 %v628
    %v823 = vunpack.c.l.b16 %v629
    %v824 = vunpack.c.h.b16 %v629
    %v825 = vunpack.c.l.b16 %v630
    %v826 = vunpack.c.h.b16 %v630
    %v827 = vunpack.c.l.b16 %v631
    %v828 = vunpack.c.h.b16 %v631
    %v829 = vunpack.c.l.b16 %v632
    %v830 = vunpack.c.h.b16 %v632
    %v831 = vunpack.c.l.b16 %v633
    %v832 = vunpack.c.h.b16 %v633
    %v833 = vunpack.c.l.b16 %v634
    %v834 = vunpack.c.h.b16 %v634
    %v835 = vunpack.c.l.b16 %v635
    %v836 = vunpack.c.h.b16 %v635
    %v837 = vunpack.c.l.b16 %v636
    %v838 = vunpack.c.h.b16 %v636
    %v839 = vunpack.c.l.b16 %v637
    %v840 = vunpack.c.h.b16 %v637
    %v841 = vunpack.c.l.b16 %v638
    %v842 = vunpack.c.h.b16 %v638
    %v843 = vpack.c.b16 %v717, %v715
    %v844 = vpack.c.b16 %v718, %v716
    %v845 = vpack.c.b16 %v721, %v719
    %v846 = vpack.c.b16 %v722, %v720
    %v847 = vpack.c.b16 %v725, %v723
    %v848 = vpack.c.b16 %v726, %v724
    %v849 = vpack.c.b16 %v729, %v727
    %v850 = vpack.c.b16 %v730, %v728
    %v851 = vpack.c.b16 %v733, %v731
    %v852 = vpack.c.b16 %v734, %v732
    %v853 = vpack.c.b16 %v737, %v735
    %v854 = vpack.c.b16 %v738, %v736
    %v855 = vpack.c.b16 %v741, %v739
    %v856 = vpack.c.b16 %v742, %v740
    %v857 = vpack.c.b16 %v745, %v743
    %v858 = vpack.c.b16 %v746, %v744
    %v859 = vpack.c.b16 %v749, %v747
    %v860 = vpack.c.b16 %v750, %v748
    %v861 = vpack.c.b16 %v753, %v751
    %v862 = vpack.c.b16 %v754, %v752
    %v863 = vpack.c.b16 %v757, %v755
    %v864 = vpack.c.b16 %v758, %v756
    %v865 = vpack.c.b16 %v761, %v759
    %v866 = vpack.c.b16 %v762, %v760
    %v867 = vpack.c.b16 %v765, %v763
    %v868 = vpack.c.b16 %v766, %v764
    %v869 = vpack.c.b16 %v769, %v767
    %v870 = vpack.c.b16 %v770, %v768
    %v871 = vpack.c.b16 %v773, %v771
    %v872 = vpack.c.b16 %v774, %v772
    %v873 = vpack.c.b16 %v777, %v775
    %v874 = vpack.c.b16 %v778, %v776
    %v875 = vpack.c.b16 %v781, %v779
    %v876 = vpack.c.b16 %v782, %v780
    %v877 = vpack.c.b16 %v785, %v783
    %v878 = vpack.c.b16 %v786, %v784
    %v879 = vpack.c.b16 %v789, %v787
    %v880 = vpack.c.b16 %v790, %v788
    %v881 = vpack.c.b16 %v793, %v791
    %v882 = vpack.c.b16 %v794, %v792
    %v883 = vpack.c.b16 %v797, %v795
    %v884 = vpack.c.b16 %v798, %v796
    %v885 = vpack.c.b16 %v801, %v799
    %v886 = vpack.c.b16 %v802, %v800
    %v887 = vpack.c.b16 %v805, %v803
    %v888 = vpack.c.b16 %v806, %v804
    %v889 = vpack.c.b16 %v809, %v807
    %v890 = vpack.c.b16 %v810, %v808
    %v891 = vpack.c.b16 %v813, %v811
    %v892 = vpack.c.b16 %v814, %v812
    %v893 = vpack.c.b16 %v817, %v815
    %v894 = vpack.c.b16 %v818, %v816
    %v895 = vpack.c.b16 %v821, %v819
    %v896 = vpack.c.b16 %v822, %v820
    %v897 = vpack.c.b16 %v825, %v823
    %v898 = vpack.c.b16 %v826, %v824
    %v899 = vpack.c.b16 %v829, %v827
    %v900 = vpack.c.b16 %v830, %v828
    %v901 = vpack.c.b16 %v833, %v831
    %v902 = vpack.c.b16 %v834, %v832
    %v903 = vpack.c.b16 %v837, %v835
    %v904 = vpack.c.b16 %v838, %v836
    %v905 = vpack.c.b16 %v841, %v839
    %v906 = vpack.c.b16 %v842, %v840
    %971 = vmatprep.subr.bf16.mxu0 %v844
    %972 = vmatpush1.bf16.msra.mxu0 %v843
    %973 = vmatprep.subr.bf16.mxu0 %v846
    %974 = vmatpush1.bf16.msra.mxu0 %v845
    %975 = vmatprep.subr.bf16.mxu0 %v848
    %976 = vmatpush1.bf16.msra.mxu0 %v847
    %977 = vmatprep.subr.bf16.mxu0 %v850
    %978 = vmatpush1.bf16.msra.mxu0 %v849
    %979 = vmatprep.subr.bf16.mxu0 %v852
    %980 = vmatpush1.bf16.msra.mxu0 %v851
    %981 = vmatprep.subr.bf16.mxu0 %v854
    %982 = vmatpush1.bf16.msra.mxu0 %v853
    %983 = vmatprep.subr.bf16.mxu0 %v856
    %984 = vmatpush1.bf16.msra.mxu0 %v855
    %985 = vmatprep.subr.bf16.mxu0 %v858
    %986 = vmatpush1.bf16.msra.mxu0 %v857
    %987 = vmatprep.subr.bf16.mxu0 %v860
    %988 = vmatpush1.bf16.msra.mxu0 %v859
    %989 = vmatprep.subr.bf16.mxu0 %v862
    %990 = vmatpush1.bf16.msra.mxu0 %v861
    %991 = vmatprep.subr.bf16.mxu0 %v864
    %992 = vmatpush1.bf16.msra.mxu0 %v863
    %993 = vmatprep.subr.bf16.mxu0 %v866
    %994 = vmatpush1.bf16.msra.mxu0 %v865
    %995 = vmatprep.subr.bf16.mxu0 %v868
    %996 = vmatpush1.bf16.msra.mxu0 %v867
    %997 = vmatprep.subr.bf16.mxu0 %v870
    %998 = vmatpush1.bf16.msra.mxu0 %v869
    %999 = vmatprep.subr.bf16.mxu0 %v872
    %1000 = vmatpush1.bf16.msra.mxu0 %v871
    %1001 = vmatprep.subr.bf16.mxu0 %v874
    %1002 = vmatpush1.bf16.msra.mxu0 %v873
    %1003 = vmatprep.mubr.bf16.mxu0 %v572
    %1004 = vmatmul.mubr.bf16.gmra.mrb[0].mxu0 %v571
    %v1005 = vpop.f32.mrb[0].mxu0
    %v1006 = vadd.f32 %v644, %v1005
    %v1007 = vpop.f32.mrb[0].mxu0
    %v1008 = vadd.f32 %v648, %v1007
    %v1009 = vpop.f32.mrb[0].mxu0
    %v1010 = vadd.f32 %v644, %v1009
    %v1011 = vpop.f32.mrb[0].mxu0
    %v1012 = vadd.f32 %v648, %v1011
    %1013 = vdwg.mxu0
    %1014 = vmatprep.subr.bf16.mxu0 %v876
    %1015 = vmatpush1.bf16.msra.mxu0 %v875
    %1016 = vmatprep.subr.bf16.mxu0 %v878
    %1017 = vmatpush1.bf16.msra.mxu0 %v877
    %1018 = vmatprep.subr.bf16.mxu0 %v880
    %1019 = vmatpush1.bf16.msra.mxu0 %v879
    %1020 = vmatprep.subr.bf16.mxu0 %v882
    %1021 = vmatpush1.bf16.msra.mxu0 %v881
    %1022 = vmatprep.subr.bf16.mxu0 %v884
    %1023 = vmatpush1.bf16.msra.mxu0 %v883
    %1024 = vmatprep.subr.bf16.mxu0 %v886
    %1025 = vmatpush1.bf16.msra.mxu0 %v885
    %1026 = vmatprep.subr.bf16.mxu0 %v888
    %1027 = vmatpush1.bf16.msra.mxu0 %v887
    %1028 = vmatprep.subr.bf16.mxu0 %v890
    %1029 = vmatpush1.bf16.msra.mxu0 %v889
    %1030 = vmatprep.subr.bf16.mxu0 %v892
    %1031 = vmatpush1.bf16.msra.mxu0 %v891
    %1032 = vmatprep.subr.bf16.mxu0 %v894
    %1033 = vmatpush1.bf16.msra.mxu0 %v893
    %1034 = vmatprep.subr.bf16.mxu0 %v896
    %1035 = vmatpush1.bf16.msra.mxu0 %v895
    %1036 = vmatprep.subr.bf16.mxu0 %v898
    %1037 = vmatpush1.bf16.msra.mxu0 %v897
    %1038 = vmatprep.subr.bf16.mxu0 %v900
    %1039 = vmatpush1.bf16.msra.mxu0 %v899
    %1040 = vmatprep.subr.bf16.mxu0 %v902
    %1041 = vmatpush1.bf16.msra.mxu0 %v901
    %1042 = vmatprep.subr.bf16.mxu0 %v904
    %1043 = vmatpush1.bf16.msra.mxu0 %v903
    %1044 = vmatprep.subr.bf16.mxu0 %v906
    %1045 = vmatpush1.bf16.msra.mxu0 %v905
    %1046 = vmatprep.mubr.bf16.mxu0 %v574
    %1047 = vmatmul.mubr.bf16.gmra.mrb[0].mxu0 %v573
    %v1048 = vpop.f32.mrb[0].mxu0
    %v1049 = vadd.f32 %v1006, %v1048
    %v1050 = vpop.f32.mrb[0].mxu0
    %v1051 = vadd.f32 %v1008, %v1050
    %v1052 = vpop.f32.mrb[0].mxu0
    %v1053 = vadd.f32 %v1010, %v1052
    %v1054 = vpop.f32.mrb[0].mxu0
    %v1055 = vadd.f32 %v1012, %v1054
    %1056 = vdwg.mxu0
    %v1057 = vmul.f32 %v1049, 0.2
    %v1058 = vmul.f32 %v1051, 0.2
    %v1059 = vmul.f32 %v1053, 0.2
    %v1060 = vmul.f32 %v1055, 0.2
    %v1061 = vmax.f32 %v1049, %v1057
    %v1062 = vmax.f32 %v1051, %v1058
    %v1063 = vmax.f32 %v1053, %v1059
    %v1064 = vmax.f32 %v1055, %v1060
    %v1065 = vpack.c.bf16 %v1063, %v1061
    %v1066 = vpack.c.bf16 %v1064, %v1062
    %v1067 = vld [vmem:[%s5] sm:$0xf]
    %v1068 = vld [vmem:[%s5 + $0x4] sm:$0xf]
    %v1069 = vld [vmem:[%s5 + $0x8] sm:$0xf]
    %v1070 = vld [vmem:[%s5 + $0xc] sm:$0xf]
    %v1071 = vld [vmem:[%s5 + $0x10] sm:$0xf]
    %v1072 = vld [vmem:[%s5 + $0x14] sm:$0xf]
    %v1073 = vld [vmem:[%s5 + $0x18] sm:$0xf]
    %v1074 = vld [vmem:[%s5 + $0x1c] sm:$0xf]
    %v1075 = vld [vmem:[%s5 + $0x20] sm:$0xf]
    %v1076 = vld [vmem:[%s5 + $0x24] sm:$0xf]
    %v1077 = vld [vmem:[%s5 + $0x28] sm:$0xf]
    %v1078 = vld [vmem:[%s5 + $0x2c] sm:$0xf]
    %v1079 = vld [vmem:[%s5 + $0x30] sm:$0xf]
    %v1080 = vld [vmem:[%s5 + $0x34] sm:$0xf]
    %v1081 = vld [vmem:[%s5 + $0x38] sm:$0xf]
    %v1082 = vld [vmem:[%s5 + $0x3c] sm:$0xf]
    %v1083 = vld [vmem:[%s5 + $0x40] sm:$0xf]
    %v1084 = vld [vmem:[%s5 + $0x44] sm:$0xf]
    %v1085 = vld [vmem:[%s5 + $0x48] sm:$0xf]
    %v1086 = vld [vmem:[%s5 + $0x4c] sm:$0xf]
    %v1087 = vld [vmem:[%s5 + $0x50] sm:$0xf]
    %v1088 = vld [vmem:[%s5 + $0x54] sm:$0xf]
    %v1089 = vld [vmem:[%s5 + $0x58] sm:$0xf]
    %v1090 = vld [vmem:[%s5 + $0x5c] sm:$0xf]
    %v1091 = vld [vmem:[%s5 + $0x60] sm:$0xf]
    %v1092 = vld [vmem:[%s5 + $0x64] sm:$0xf]
    %v1093 = vld [vmem:[%s5 + $0x68] sm:$0xf]
    %v1094 = vld [vmem:[%s5 + $0x6c] sm:$0xf]
    %v1095 = vld [vmem:[%s5 + $0x70] sm:$0xf]
    %v1096 = vld [vmem:[%s5 + $0x74] sm:$0xf]
    %v1097 = vld [vmem:[%s5 + $0x78] sm:$0xf]
    %v1098 = vld [vmem:[%s5 + $0x7c] sm:$0xf]
    %v1099 = vld [vmem:[#allocation2] sm:$0x1]
    %v1101 = vlaneseq
    %v1102 = vshrl.u32 %v1101, 7
    %v1103 = vsub.s32 0, %v1102
    %v1104 = vrot.slane %v1099, %v1103
    %v1138 = vunpack.c.l.b16 %v1067
    %v1139 = vunpack.c.l.b16 %v1068
    %v1140 = vunpack.c.l.b16 %v1069
    %v1141 = vunpack.c.l.b16 %v1070
    %v1142 = vunpack.c.l.b16 %v1071
    %v1143 = vunpack.c.l.b16 %v1072
    %v1144 = vunpack.c.l.b16 %v1073
    %v1145 = vunpack.c.l.b16 %v1074
    %v1146 = vunpack.c.l.b16 %v1075
    %v1147 = vunpack.c.l.b16 %v1076
    %v1148 = vunpack.c.l.b16 %v1077
    %v1149 = vunpack.c.l.b16 %v1078
    %v1150 = vunpack.c.l.b16 %v1079
    %v1151 = vunpack.c.l.b16 %v1080
    %v1152 = vunpack.c.l.b16 %v1081
    %v1153 = vunpack.c.l.b16 %v1082
    %v1154 = vunpack.c.l.b16 %v1083
    %v1155 = vunpack.c.l.b16 %v1084
    %v1156 = vunpack.c.l.b16 %v1085
    %v1157 = vunpack.c.l.b16 %v1086
    %v1158 = vunpack.c.l.b16 %v1087
    %v1159 = vunpack.c.l.b16 %v1088
    %v1160 = vunpack.c.l.b16 %v1089
    %v1161 = vunpack.c.l.b16 %v1090
    %v1162 = vunpack.c.l.b16 %v1091
    %v1163 = vunpack.c.l.b16 %v1092
    %v1164 = vunpack.c.l.b16 %v1093
    %v1165 = vunpack.c.l.b16 %v1094
    %v1166 = vunpack.c.l.b16 %v1095
    %v1167 = vunpack.c.l.b16 %v1096
    %v1168 = vunpack.c.l.b16 %v1097
    %v1169 = vunpack.c.l.b16 %v1098
    %v1170 = vpack.c.b16 %v1139, %v1138
    %v1171 = vpack.c.b16 %v1141, %v1140
    %v1172 = vpack.c.b16 %v1143, %v1142
    %v1173 = vpack.c.b16 %v1145, %v1144
    %v1174 = vpack.c.b16 %v1147, %v1146
    %v1175 = vpack.c.b16 %v1149, %v1148
    %v1176 = vpack.c.b16 %v1151, %v1150
    %v1177 = vpack.c.b16 %v1153, %v1152
    %v1178 = vpack.c.b16 %v1155, %v1154
    %v1179 = vpack.c.b16 %v1157, %v1156
    %v1180 = vpack.c.b16 %v1159, %v1158
    %v1181 = vpack.c.b16 %v1161, %v1160
    %v1182 = vpack.c.b16 %v1163, %v1162
    %v1183 = vpack.c.b16 %v1165, %v1164
    %v1184 = vpack.c.b16 %v1167, %v1166
    %v1185 = vpack.c.b16 %v1169, %v1168
    %1202 = vmatprep.subr.bf16.mxu0 0
    %1203 = vmatpush1.bf16.msra.mxu0 %v1170
    %1204 = vmatprep.subr.bf16.mxu0 0
    %1205 = vmatpush1.bf16.msra.mxu0 %v1171
    %1206 = vmatprep.subr.bf16.mxu0 0
    %1207 = vmatpush1.bf16.msra.mxu0 %v1172
    %1208 = vmatprep.subr.bf16.mxu0 0
    %1209 = vmatpush1.bf16.msra.mxu0 %v1173
    %1210 = vmatprep.subr.bf16.mxu0 0
    %1211 = vmatpush1.bf16.msra.mxu0 %v1174
    %1212 = vmatprep.subr.bf16.mxu0 0
    %1213 = vmatpush1.bf16.msra.mxu0 %v1175
    %1214 = vmatprep.subr.bf16.mxu0 0
    %1215 = vmatpush1.bf16.msra.mxu0 %v1176
    %1216 = vmatprep.subr.bf16.mxu0 0
    %1217 = vmatpush1.bf16.msra.mxu0 %v1177
    %1218 = vmatprep.subr.bf16.mxu0 0
    %1219 = vmatpush1.bf16.msra.mxu0 %v1178
    %1220 = vmatprep.subr.bf16.mxu0 0
    %1221 = vmatpush1.bf16.msra.mxu0 %v1179
    %1222 = vmatprep.subr.bf16.mxu0 0
    %1223 = vmatpush1.bf16.msra.mxu0 %v1180
    %1224 = vmatprep.subr.bf16.mxu0 0
    %1225 = vmatpush1.bf16.msra.mxu0 %v1181
    %1226 = vmatprep.subr.bf16.mxu0 0
    %1227 = vmatpush1.bf16.msra.mxu0 %v1182
    %1228 = vmatprep.subr.bf16.mxu0 0
    %1229 = vmatpush1.bf16.msra.mxu0 %v1183
    %1230 = vmatprep.subr.bf16.mxu0 0
    %1231 = vmatpush1.bf16.msra.mxu0 %v1184
    %1232 = vmatprep.subr.bf16.mxu0 0
    %1233 = vmatpush1.bf16.msra.mxu0 %v1185
    %1234 = vmatprep.mubr.bf16.mxu0 %v1066
    %1235 = vmatmul.mubr.bf16.gmra.mrb[0].mxu0 %v1065
    %v1236 = vpop.f32.mrb[0].mxu0
    %v1237 = vadd.f32 %v1104, %v1236
    %v1238 = vpop.f32.mrb[0].mxu0
    %v1239 = vpop.f32.mrb[0].mxu0
    %v1240 = vadd.f32 %v1104, %v1239
    %v1241 = vpop.f32.mrb[0].mxu0
    %1242 = vdwg.mxu0
    %vm1243 = vcmask 7168
    %1244 = vst.msk [vmem:[%s7] sm:$0xff] %vm1243, %v1237
    %1245 = vst.msk [vmem:[%s7 + $0x8] sm:$0xff] %vm1243, %v1240
    // Predicated region
    $region38: #{tpu_custom_call.1} parent=1 // pred_check
      _
    $region39: #{tpu_custom_call.1} parent=1 // pred_check_branch
      %1247 = sbr.rel (0) target = $region41
    $region40: #{tpu_custom_call.1} parent=1 // pred_region
      _
    $region41: #{tpu_custom_call.1} parent=1 // pred_fallthru
      _
    // Predicated region
    $region42: #{tpu_custom_call.1} parent=1 // pred_check
      _
    $region43: #{tpu_custom_call.1} parent=1 // pred_check_branch
      %1249 = sbr.rel (0) target = $region45
    $region44: #{tpu_custom_call.1} parent=1 // pred_region
      _
    $region45: #{tpu_custom_call.1} parent=1 // pred_fallthru
      _
    %1250 = vsyncpa [#allocation4], 1
    %1251 = vsyncpa [#allocation6], 1

// kernel: tpu_custom_call.1
$region0: #{tpu_custom_call.1}
  #allocation0 [shape = 'u32[]', space=smem, size = 0x4, offset = 0x4, fixed_abs, tag = 'smem constant byte address 0x4 - core index']
  #allocation1 [shape = 'u32[144,128]{1,0:T(1,128)}', space=vmem, size = 0x12000, scoped, tag = 'internal scratch']
  #allocation2 [shape = 'f32[1,1]{1,0:T(1,128)S(1)}', space=vmem, size = 0x200, scoped, tag = 'scoped memory for tpu_custom_call.1']
  %s0 = inlined_call_operand.vmem [shape: f32[16,256], index: 0, kind: input, shape index: {}]
  %s1 = inlined_call_operand.hbm [shape: bf16[256,512], index: 1, kind: input, shape index: {}]
  %s2 = inlined_call_operand.vmem [shape: f32[1,512], index: 2, kind: input, shape index: {}]
  %s3 = inlined_call_operand.hbm [shape: bf16[512,256], index: 3, kind: input, shape index: {}]
  %s4 = inlined_call_operand.vmem [shape: f32[1,256], index: 4, kind: input, shape index: {}]
  %s5 = inlined_call_operand.vmem [shape: bf16[256,1], index: 5, kind: input, shape index: {}]
  %s6 = inlined_call_operand.<no memory space> [shape: f32[1,1], index: 6, kind: input, shape index: {}]
  %s7 = inlined_call_operand.vmem [shape: f32[16,1], index: 7, kind: output, shape index: {}]
  %s8 = sld [smem:[#allocation0]]
  $region46: #{tpu_custom_call.1} parent=0
    _
  %s10 = ssub.s32 1, %s8
  %s11 = scalar_select 0, %s10, %s8
  %v12 = vstv %s6
  %13 = vst [vmem:[#allocation2] sm:$0x1] %v12
  $region1: #{tpu_custom_call.1} parent=0
    #allocation3 [shape = 'u8[262144]{0}', space=vmem, size = 0x40000, scoped, tag = 'input window, operand 1, single buffered']
    #allocation4 [shape = 's32[1]{0}', space=sflag, size = 0x4, scoped, tag = 'scoped memory for tpu_custom_call.1']
    #allocation5 [shape = 'u8[262144]{0}', space=vmem, size = 0x40000, scoped, tag = 'input window, operand 3, single buffered']
    #allocation6 [shape = 's32[1]{0}', space=sflag, size = 0x4, scoped, tag = 'scoped memory for tpu_custom_call.1']
    %14 = vsyncpa [#allocation4], 0
    %15 = vsyncpa [#allocation6], 0
    // Predicated region
    $region2: #{tpu_custom_call.1} parent=1 // pred_check
      _
    $region3: #{tpu_custom_call.1} parent=1 // pred_check_branch
      %17 = sbr.rel (0) target = $region5
    $region4: #{tpu_custom_call.1} parent=1 // pred_region
      _
    $region5: #{tpu_custom_call.1} parent=1 // pred_fallthru
      _
    // Predicated region
    $region6: #{tpu_custom_call.1} parent=1 // pred_check
      _
    $region7: #{tpu_custom_call.1} parent=1 // pred_check_branch
      %19 = sbr.rel (0) target = $region9
    $region8: #{tpu_custom_call.1} parent=1 // pred_region
      %s21 = ssub.s32 8192, 8192
      %22 = vsyncadd [#allocation4], %s21
      %s23 = sshll.u32 [#allocation3], 4
      %s24 = int_to_ptr.vmem [resolvable:$true] %s23
      %29 = dma.hbm_to_vmem [thread:$0]  %s1, 8192, %s24, [#allocation4], 256, 256, 16
    $region9: #{tpu_custom_call.1} parent=1 // pred_fallthru
      _
    // Predicated region
    $region10: #{tpu_custom_call.1} parent=1 // pred_check
      _
    $region11: #{tpu_custom_call.1} parent=1 // pred_check_branch
      %31 = sbr.rel (0) target = $region13
    $region12: #{tpu_custom_call.1} parent=1 // pred_region
      _
    $region13: #{tpu_custom_call.1} parent=1 // pred_fallthru
      _
    // Predicated region
    $region14: #{tpu_custom_call.1} parent=1 // pred_check
      _
    $region15: #{tpu_custom_call.1} parent=1 // pred_check_branch
      %33 = sbr.rel (0) target = $region17
    $region16: #{tpu_custom_call.1} parent=1 // pred_region
      %s35 = ssub.s32 8192, 8192
      %36 = vsyncadd [#allocation6], %s35
      %s37 = sshll.u32 [#allocation5], 4
      %s38 = int_to_ptr.vmem [resolvable:$true] %s37
      %43 = dma.hbm_to_vmem [thread:$0]  %s3, 8192, %s38, [#allocation6], 128, 128, 8
    $region17: #{tpu_custom_call.1} parent=1 // pred_fallthru
      _
    // Predicated region
    $region18: #{tpu_custom_call.1} parent=1 // pred_check
      _
    $region19: #{tpu_custom_call.1} parent=1 // pred_check_branch
      %45 = sbr.rel (0) target = $region21
    $region20: #{tpu_custom_call.1} parent=1 // pred_region
      _
    $region21: #{tpu_custom_call.1} parent=1 // pred_fallthru
      _
    // Predicated region
    $region22: #{tpu_custom_call.1} parent=1 // pred_check
      _
    $region23: #{tpu_custom_call.1} parent=1 // pred_check_branch
      %47 = sbr.rel (0) target = $region25
    $region24: #{tpu_custom_call.1} parent=1 // pred_region
      _
    $region25: #{tpu_custom_call.1} parent=1 // pred_fallthru
      _
    // Predicated region
    $region26: #{tpu_custom_call.1} parent=1 // pred_check
      _
    $region27: #{tpu_custom_call.1} parent=1 // pred_check_branch
      %49 = sbr.rel (0) target = $region29
    $region28: #{tpu_custom_call.1} parent=1 // pred_region
      _
    $region29: #{tpu_custom_call.1} parent=1 // pred_fallthru
      _
    // Predicated region
    $region30: #{tpu_custom_call.1} parent=1 // pred_check
      _
    $region31: #{tpu_custom_call.1} parent=1 // pred_check_branch
      %51 = sbr.rel (0) target = $region33
    $region32: #{tpu_custom_call.1} parent=1 // pred_region
      %52 = dma.done [#allocation4], 8192
    $region33: #{tpu_custom_call.1} parent=1 // pred_fallthru
      _
    // Predicated region
    $region34: #{tpu_custom_call.1} parent=1 // pred_check
      _
    $region35: #{tpu_custom_call.1} parent=1 // pred_check_branch
      %54 = sbr.rel (0) target = $region37
    $region36: #{tpu_custom_call.1} parent=1 // pred_region
      %55 = dma.done [#allocation6], 8192
    $region37: #{tpu_custom_call.1} parent=1 // pred_fallthru
      _
    %v57 = vld [vmem:[%s0] sm:$0xff]
    %v58 = vld [vmem:[%s0 + $0x8] sm:$0xff]
    %v59 = vld [vmem:[%s0 + $0x10] sm:$0xff]
    %v60 = vld [vmem:[%s0 + $0x18] sm:$0xff]
    %v61 = vpack.c.bf16 %v59, %v57
    %v62 = vpack.c.bf16 %v60, %v58
    %v63 = vld [vmem:[#allocation3] sm:$0xff]
    %v64 = vld [vmem:[#allocation3 + $0x8] sm:$0xff]
    %v65 = vld [vmem:[#allocation3 + $0x10] sm:$0xff]
    %v66 = vld [vmem:[#allocation3 + $0x18] sm:$0xff]
    %v67 = vld [vmem:[#allocation3 + $0x20] sm:$0xff]
    %v68 = vld [vmem:[#allocation3 + $0x28] sm:$0xff]
    %v69 = vld [vmem:[#allocation3 + $0x30] sm:$0xff]
    %v70 = vld [vmem:[#allocation3 + $0x38] sm:$0xff]
    %v71 = vld [vmem:[#allocation3 + $0x40] sm:$0xff]
    %v72 = vld [vmem:[#allocation3 + $0x48] sm:$0xff]
    %v73 = vld [vmem:[#allocation3 + $0x50] sm:$0xff]
    %v74 = vld [vmem:[#allocation3 + $0x58] sm:$0xff]
    %v75 = vld [vmem:[#allocation3 + $0x60] sm:$0xff]
    %v76 = vld [vmem:[#allocation3 + $0x68] sm:$0xff]
    %v77 = vld [vmem:[#allocation3 + $0x70] sm:$0xff]
    %v78 = vld [vmem:[#allocation3 + $0x78] sm:$0xff]
    %v79 = vld [vmem:[#allocation3 + $0x80] sm:$0xff]
    %v80 = vld [vmem:[#allocation3 + $0x88] sm:$0xff]
    %v81 = vld [vmem:[#allocation3 + $0x90] sm:$0xff]
    %v82 = vld [vmem:[#allocation3 + $0x98] sm:$0xff]
    %v83 = vld [vmem:[#allocation3 + $0xa0] sm:$0xff]
    %v84 = vld [vmem:[#allocation3 + $0xa8] sm:$0xff]
    %v85 = vld [vmem:[#allocation3 + $0xb0] sm:$0xff]
    %v86 = vld [vmem:[#allocation3 + $0xb8] sm:$0xff]
    %v87 = vld [vmem:[#allocation3 + $0xc0] sm:$0xff]
    %v88 = vld [vmem:[#allocation3 + $0xc8] sm:$0xff]
    %v89 = vld [vmem:[#allocation3 + $0xd0] sm:$0xff]
    %v90 = vld [vmem:[#allocation3 + $0xd8] sm:$0xff]
    %v91 = vld [vmem:[#allocation3 + $0xe0] sm:$0xff]
    %v92 = vld [vmem:[#allocation3 + $0xe8] sm:$0xff]
    %v93 = vld [vmem:[#allocation3 + $0xf0] sm:$0xff]
    %v94 = vld [vmem:[#allocation3 + $0xf8] sm:$0xff]
    %v95 = vld [vmem:[#allocation3 + $0x100] sm:$0xff]
    %v96 = vld [vmem:[#allocation3 + $0x108] sm:$0xff]
    %v97 = vld [vmem:[#allocation3 + $0x110] sm:$0xff]
    %v98 = vld [vmem:[#allocation3 + $0x118] sm:$0xff]
    %v99 = vld [vmem:[#allocation3 + $0x120] sm:$0xff]
    %v100 = vld [vmem:[#allocation3 + $0x128] sm:$0xff]
    %v101 = vld [vmem:[#allocation3 + $0x130] sm:$0xff]
    %v102 = vld [vmem:[#allocation3 + $0x138] sm:$0xff]
    %v103 = vld [vmem:[#allocation3 + $0x140] sm:$0xff]
    %v104 = vld [vmem:[#allocation3 + $0x148] sm:$0xff]
    %v105 = vld [vmem:[#allocation3 + $0x150] sm:$0xff]
    %v106 = vld [vmem:[#allocation3 + $0x158] sm:$0xff]
    %v107 = vld [vmem:[#allocation3 + $0x160] sm:$0xff]
    %v108 = vld [vmem:[#allocation3 + $0x168] sm:$0xff]
    %v109 = vld [vmem:[#allocation3 + $0x170] sm:$0xff]
    %v110 = vld [vmem:[#allocation3 + $0x178] sm:$0xff]
    %v111 = vld [vmem:[#allocation3 + $0x180] sm:$0xff]
    %v112 = vld [vmem:[#allocation3 + $0x188] sm:$0xff]
    %v113 = vld [vmem:[#allocation3 + $0x190] sm:$0xff]
    %v114 = vld [vmem:[#allocation3 + $0x198] sm:$0xff]
    %v115 = vld [vmem:[#allocation3 + $0x1a0] sm:$0xff]
    %v116 = vld [vmem:[#allocation3 + $0x1a8] sm:$0xff]
    %v117 = vld [vmem:[#allocation3 + $0x1b0] sm:$0xff]
    %v118 = vld [vmem:[#allocation3 + $0x1b8] sm:$0xff]
    %v119 = vld [vmem:[#allocation3 + $0x1c0] sm:$0xff]
    %v120 = vld [vmem:[#allocation3 + $0x1c8] sm:$0xff]
    %v121 = vld [vmem:[#allocation3 + $0x1d0] sm:$0xff]
    %v122 = vld [vmem:[#allocation3 + $0x1d8] sm:$0xff]
    %v123 = vld [vmem:[#allocation3 + $0x1e0] sm:$0xff]
    %v124 = vld [vmem:[#allocation3 + $0x1e8] sm:$0xff]
    %v125 = vld [vmem:[#allocation3 + $0x1f0] sm:$0xff]
    %v126 = vld [vmem:[#allocation3 + $0x1f8] sm:$0xff]
    %v127 = vld [vmem:[%s2] sm:$0xf]
    %v129 = vlaneseq
    %v130 = vshrl.u32 %v129, 7
    %v131 = vsub.s32 0, %v130
    %v132 = vrot.slane %v127, %v131
    %v133 = vlaneseq
    %v134 = vshrl.u32 %v133, 7
    %v135 = vsub.s32 1, %v134
    %v136 = vrot.slane %v127, %v135
    %v137 = vlaneseq
    %v138 = vshrl.u32 %v137, 7
    %v139 = vsub.s32 2, %v138
    %v140 = vrot.slane %v127, %v139
    %v141 = vlaneseq
    %v142 = vshrl.u32 %v141, 7
    %v143 = vsub.s32 3, %v142
    %v144 = vrot.slane %v127, %v143
    %v213 = vunpack.c.l.b16 %v63
    %v214 = vunpack.c.h.b16 %v63
    %v215 = vunpack.c.l.b16 %v64
    %v216 = vunpack.c.h.b16 %v64
    %v217 = vunpack.c.l.b16 %v65
    %v218 = vunpack.c.h.b16 %v65
    %v219 = vunpack.c.l.b16 %v66
    %v220 = vunpack.c.h.b16 %v66
    %v221 = vunpack.c.l.b16 %v67
    %v222 = vunpack.c.h.b16 %v67
    %v223 = vunpack.c.l.b16 %v68
    %v224 = vunpack.c.h.b16 %v68
    %v225 = vunpack.c.l.b16 %v69
    %v226 = vunpack.c.h.b16 %v69
    %v227 = vunpack.c.l.b16 %v70
    %v228 = vunpack.c.h.b16 %v70
    %v229 = vunpack.c.l.b16 %v71
    %v230 = vunpack.c.h.b16 %v71
    %v231 = vunpack.c.l.b16 %v72
    %v232 = vunpack.c.h.b16 %v72
    %v233 = vunpack.c.l.b16 %v73
    %v234 = vunpack.c.h.b16 %v73
    %v235 = vunpack.c.l.b16 %v74
    %v236 = vunpack.c.h.b16 %v74
    %v237 = vunpack.c.l.b16 %v75
    %v238 = vunpack.c.h.b16 %v75
    %v239 = vunpack.c.l.b16 %v76
    %v240 = vunpack.c.h.b16 %v76
    %v241 = vunpack.c.l.b16 %v77
    %v242 = vunpack.c.h.b16 %v77
    %v243 = vunpack.c.l.b16 %v78
    %v244 = vunpack.c.h.b16 %v78
    %v245 = vunpack.c.l.b16 %v79
    %v246 = vunpack.c.h.b16 %v79
    %v247 = vunpack.c.l.b16 %v80
    %v248 = vunpack.c.h.b16 %v80
    %v249 = vunpack.c.l.b16 %v81
    %v250 = vunpack.c.h.b16 %v81
    %v251 = vunpack.c.l.b16 %v82
    %v252 = vunpack.c.h.b16 %v82
    %v253 = vunpack.c.l.b16 %v83
    %v254 = vunpack.c.h.b16 %v83
    %v255 = vunpack.c.l.b16 %v84
    %v256 = vunpack.c.h.b16 %v84
    %v257 = vunpack.c.l.b16 %v85
    %v258 = vunpack.c.h.b16 %v85
    %v259 = vunpack.c.l.b16 %v86
    %v260 = vunpack.c.h.b16 %v86
    %v261 = vunpack.c.l.b16 %v87
    %v262 = vunpack.c.h.b16 %v87
    %v263 = vunpack.c.l.b16 %v88
    %v264 = vunpack.c.h.b16 %v88
    %v265 = vunpack.c.l.b16 %v89
    %v266 = vunpack.c.h.b16 %v89
    %v267 = vunpack.c.l.b16 %v90
    %v268 = vunpack.c.h.b16 %v90
    %v269 = vunpack.c.l.b16 %v91
    %v270 = vunpack.c.h.b16 %v91
    %v271 = vunpack.c.l.b16 %v92
    %v272 = vunpack.c.h.b16 %v92
    %v273 = vunpack.c.l.b16 %v93
    %v274 = vunpack.c.h.b16 %v93
    %v275 = vunpack.c.l.b16 %v94
    %v276 = vunpack.c.h.b16 %v94
    %v277 = vunpack.c.l.b16 %v95
    %v278 = vunpack.c.h.b16 %v95
    %v279 = vunpack.c.l.b16 %v96
    %v280 = vunpack.c.h.b16 %v96
    %v281 = vunpack.c.l.b16 %v97
    %v282 = vunpack.c.h.b16 %v97
    %v283 = vunpack.c.l.b16 %v98
    %v284 = vunpack.c.h.b16 %v98
    %v285 = vunpack.c.l.b16 %v99
    %v286 = vunpack.c.h.b16 %v99
    %v287 = vunpack.c.l.b16 %v100
    %v288 = vunpack.c.h.b16 %v100
    %v289 = vunpack.c.l.b16 %v101
    %v290 = vunpack.c.h.b16 %v101
    %v291 = vunpack.c.l.b16 %v102
    %v292 = vunpack.c.h.b16 %v102
    %v293 = vunpack.c.l.b16 %v103
    %v294 = vunpack.c.h.b16 %v103
    %v295 = vunpack.c.l.b16 %v104
    %v296 = vunpack.c.h.b16 %v104
    %v297 = vunpack.c.l.b16 %v105
    %v298 = vunpack.c.h.b16 %v105
    %v299 = vunpack.c.l.b16 %v106
    %v300 = vunpack.c.h.b16 %v106
    %v301 = vunpack.c.l.b16 %v107
    %v302 = vunpack.c.h.b16 %v107
    %v303 = vunpack.c.l.b16 %v108
    %v304 = vunpack.c.h.b16 %v108
    %v305 = vunpack.c.l.b16 %v109
    %v306 = vunpack.c.h.b16 %v109
    %v307 = vunpack.c.l.b16 %v110
    %v308 = vunpack.c.h.b16 %v110
    %v309 = vunpack.c.l.b16 %v111
    %v310 = vunpack.c.h.b16 %v111
    %v311 = vunpack.c.l.b16 %v112
    %v312 = vunpack.c.h.b16 %v112
    %v313 = vunpack.c.l.b16 %v113
    %v314 = vunpack.c.h.b16 %v113
    %v315 = vunpack.c.l.b16 %v114
    %v316 = vunpack.c.h.b16 %v114
    %v317 = vunpack.c.l.b16 %v115
    %v318 = vunpack.c.h.b16 %v115
    %v319 = vunpack.c.l.b16 %v116
    %v320 = vunpack.c.h.b16 %v116
    %v321 = vunpack.c.l.b16 %v117
    %v322 = vunpack.c.h.b16 %v117
    %v323 = vunpack.c.l.b16 %v118
    %v324 = vunpack.c.h.b16 %v118
    %v325 = vunpack.c.l.b16 %v119
    %v326 = vunpack.c.h.b16 %v119
    %v327 = vunpack.c.l.b16 %v120
    %v328 = vunpack.c.h.b16 %v120
    %v329 = vunpack.c.l.b16 %v121
    %v330 = vunpack.c.h.b16 %v121
    %v331 = vunpack.c.l.b16 %v122
    %v332 = vunpack.c.h.b16 %v122
    %v333 = vunpack.c.l.b16 %v123
    %v334 = vunpack.c.h.b16 %v123
    %v335 = vunpack.c.l.b16 %v124
    %v336 = vunpack.c.h.b16 %v124
    %v337 = vunpack.c.l.b16 %v125
    %v338 = vunpack.c.h.b16 %v125
    %v339 = vunpack.c.l.b16 %v126
    %v340 = vunpack.c.h.b16 %v126
    %v341 = vpack.c.b16 %v217, %v213
    %v342 = vpack.c.b16 %v218, %v214
    %v343 = vpack.c.b16 %v219, %v215
    %v344 = vpack.c.b16 %v220, %v216
    %v345 = vpack.c.b16 %v225, %v221
    %v346 = vpack.c.b16 %v226, %v222
    %v347 = vpack.c.b16 %v227, %v223
    %v348 = vpack.c.b16 %v228, %v224
    %v349 = vpack.c.b16 %v233, %v229
    %v350 = vpack.c.b16 %v234, %v230
    %v351 = vpack.c.b16 %v235, %v231
    %v352 = vpack.c.b16 %v236, %v232
    %v353 = vpack.c.b16 %v241, %v237
    %v354 = vpack.c.b16 %v242, %v238
    %v355 = vpack.c.b16 %v243, %v239
    %v356 = vpack.c.b16 %v244, %v240
    %v357 = vpack.c.b16 %v249, %v245
    %v358 = vpack.c.b16 %v250, %v246
    %v359 = vpack.c.b16 %v251, %v247
    %v360 = vpack.c.b16 %v252, %v248
    %v361 = vpack.c.b16 %v257, %v253
    %v362 = vpack.c.b16 %v258, %v254
    %v363 = vpack.c.b16 %v259, %v255
    %v364 = vpack.c.b16 %v260, %v256
    %v365 = vpack.c.b16 %v265, %v261
    %v366 = vpack.c.b16 %v266, %v262
    %v367 = vpack.c.b16 %v267, %v263
    %v368 = vpack.c.b16 %v268, %v264
    %v369 = vpack.c.b16 %v273, %v269
    %v370 = vpack.c.b16 %v274, %v270
    %v371 = vpack.c.b16 %v275, %v271
    %v372 = vpack.c.b16 %v276, %v272
    %v373 = vpack.c.b16 %v281, %v277
    %v374 = vpack.c.b16 %v282, %v278
    %v375 = vpack.c.b16 %v283, %v279
    %v376 = vpack.c.b16 %v284, %v280
    %v377 = vpack.c.b16 %v289, %v285
    %v378 = vpack.c.b16 %v290, %v286
    %v379 = vpack.c.b16 %v291, %v287
    %v380 = vpack.c.b16 %v292, %v288
    %v381 = vpack.c.b16 %v297, %v293
    %v382 = vpack.c.b16 %v298, %v294
    %v383 = vpack.c.b16 %v299, %v295
    %v384 = vpack.c.b16 %v300, %v296
    %v385 = vpack.c.b16 %v305, %v301
    %v386 = vpack.c.b16 %v306, %v302
    %v387 = vpack.c.b16 %v307, %v303
    %v388 = vpack.c.b16 %v308, %v304
    %v389 = vpack.c.b16 %v313, %v309
    %v390 = vpack.c.b16 %v314, %v310
    %v391 = vpack.c.b16 %v315, %v311
    %v392 = vpack.c.b16 %v316, %v312
    %v393 = vpack.c.b16 %v321, %v317
    %v394 = vpack.c.b16 %v322, %v318
    %v395 = vpack.c.b16 %v323, %v319
    %v396 = vpack.c.b16 %v324, %v320
    %v397 = vpack.c.b16 %v329, %v325
    %v398 = vpack.c.b16 %v330, %v326
    %v399 = vpack.c.b16 %v331, %v327
    %v400 = vpack.c.b16 %v332, %v328
    %v401 = vpack.c.b16 %v337, %v333
    %v402 = vpack.c.b16 %v338, %v334
    %v403 = vpack.c.b16 %v339, %v335
    %v404 = vpack.c.b16 %v340, %v336
    %469 = vmatprep.subr.bf16.mxu0 %v342
    %470 = vmatpush1.bf16.msra.mxu0 %v341
    %471 = vmatprep.subr.bf16.mxu0 %v346
    %472 = vmatpush1.bf16.msra.mxu0 %v345
    %473 = vmatprep.subr.bf16.mxu0 %v350
    %474 = vmatpush1.bf16.msra.mxu0 %v349
    %475 = vmatprep.subr.bf16.mxu0 %v354
    %476 = vmatpush1.bf16.msra.mxu0 %v353
    %477 = vmatprep.subr.bf16.mxu0 %v358
    %478 = vmatpush1.bf16.msra.mxu0 %v357
    %479 = vmatprep.subr.bf16.mxu0 %v362
    %480 = vmatpush1.bf16.msra.mxu0 %v361
    %481 = vmatprep.subr.bf16.mxu0 %v366
    %482 = vmatpush1.bf16.msra.mxu0 %v365
    %483 = vmatprep.subr.bf16.mxu0 %v370
    %484 = vmatpush1.bf16.msra.mxu0 %v369
    %485 = vmatprep.subr.bf16.mxu0 %v374
    %486 = vmatpush1.bf16.msra.mxu0 %v373
    %487 = vmatprep.subr.bf16.mxu0 %v378
    %488 = vmatpush1.bf16.msra.mxu0 %v377
    %489 = vmatprep.subr.bf16.mxu0 %v382
    %490 = vmatpush1.bf16.msra.mxu0 %v381
    %491 = vmatprep.subr.bf16.mxu0 %v386
    %492 = vmatpush1.bf16.msra.mxu0 %v385
    %493 = vmatprep.subr.bf16.mxu0 %v390
    %494 = vmatpush1.bf16.msra.mxu0 %v389
    %495 = vmatprep.subr.bf16.mxu0 %v394
    %496 = vmatpush1.bf16.msra.mxu0 %v393
    %497 = vmatprep.subr.bf16.mxu0 %v398
    %498 = vmatpush1.bf16.msra.mxu0 %v397
    %499 = vmatprep.subr.bf16.mxu0 %v402
    %500 = vmatpush1.bf16.msra.mxu0 %v401
    %501 = vmatprep.mubr.bf16.mxu0 %v62
    %502 = vmatmul.mubr.bf16.gmra.mrb[0].mxu0 %v61
    %v503 = vpop.f32.mrb[0].mxu0
    %v504 = vadd.f32 %v132, %v503
    %v505 = vpop.f32.mrb[0].mxu0
    %v506 = vadd.f32 %v136, %v505
    %v507 = vpop.f32.mrb[0].mxu0
    %v508 = vadd.f32 %v132, %v507
    %v509 = vpop.f32.mrb[0].mxu0
    %v510 = vadd.f32 %v136, %v509
    %511 = vdwg.mxu0
    %512 = vmatprep.subr.bf16.mxu0 %v344
    %513 = vmatpush1.bf16.msra.mxu0 %v343
    %514 = vmatprep.subr.bf16.mxu0 %v348
    %515 = vmatpush1.bf16.msra.mxu0 %v347
    %516 = vmatprep.subr.bf16.mxu0 %v352
    %517 = vmatpush1.bf16.msra.mxu0 %v351
    %518 = vmatprep.subr.bf16.mxu0 %v356
    %519 = vmatpush1.bf16.msra.mxu0 %v355
    %520 = vmatprep.subr.bf16.mxu0 %v360
    %521 = vmatpush1.bf16.msra.mxu0 %v359
    %522 = vmatprep.subr.bf16.mxu0 %v364
    %523 = vmatpush1.bf16.msra.mxu0 %v363
    %524 = vmatprep.subr.bf16.mxu0 %v368
    %525 = vmatpush1.bf16.msra.mxu0 %v367
    %526 = vmatprep.subr.bf16.mxu0 %v372
    %527 = vmatpush1.bf16.msra.mxu0 %v371
    %528 = vmatprep.subr.bf16.mxu0 %v376
    %529 = vmatpush1.bf16.msra.mxu0 %v375
    %530 = vmatprep.subr.bf16.mxu0 %v380
    %531 = vmatpush1.bf16.msra.mxu0 %v379
    %532 = vmatprep.subr.bf16.mxu0 %v384
    %533 = vmatpush1.bf16.msra.mxu0 %v383
    %534 = vmatprep.subr.bf16.mxu0 %v388
    %535 = vmatpush1.bf16.msra.mxu0 %v387
    %536 = vmatprep.subr.bf16.mxu0 %v392
    %537 = vmatpush1.bf16.msra.mxu0 %v391
    %538 = vmatprep.subr.bf16.mxu0 %v396
    %539 = vmatpush1.bf16.msra.mxu0 %v395
    %540 = vmatprep.subr.bf16.mxu0 %v400
    %541 = vmatpush1.bf16.msra.mxu0 %v399
    %542 = vmatprep.subr.bf16.mxu0 %v404
    %543 = vmatpush1.bf16.msra.mxu0 %v403
    %544 = vmatprep.mubr.bf16.mxu0 %v62
    %545 = vmatmul.mubr.bf16.gmra.mrb[0].mxu0 %v61
    %v546 = vpop.f32.mrb[0].mxu0
    %v547 = vadd.f32 %v140, %v546
    %v548 = vpop.f32.mrb[0].mxu0
    %v549 = vadd.f32 %v144, %v548
    %v550 = vpop.f32.mrb[0].mxu0
    %v551 = vadd.f32 %v140, %v550
    %v552 = vpop.f32.mrb[0].mxu0
    %v553 = vadd.f32 %v144, %v552
    %554 = vdwg.mxu0
    %v555 = vmul.f32 %v504, 0.2
    %v556 = vmul.f32 %v506, 0.2
    %v557 = vmul.f32 %v547, 0.2
    %v558 = vmul.f32 %v549, 0.2
    %v559 = vmul.f32 %v508, 0.2
    %v560 = vmul.f32 %v510, 0.2
    %v561 = vmul.f32 %v551, 0.2
    %v562 = vmul.f32 %v553, 0.2
    %v563 = vmax.f32 %v504, %v555
    %v564 = vmax.f32 %v506, %v556
    %v565 = vmax.f32 %v547, %v557
    %v566 = vmax.f32 %v549, %v558
    %v567 = vmax.f32 %v508, %v559
    %v568 = vmax.f32 %v510, %v560
    %v569 = vmax.f32 %v551, %v561
    %v570 = vmax.f32 %v553, %v562
    %v571 = vpack.c.bf16 %v567, %v563
    %v572 = vpack.c.bf16 %v568, %v564
    %v573 = vpack.c.bf16 %v569, %v565
    %v574 = vpack.c.bf16 %v570, %v566
    %v575 = vld [vmem:[#allocation5] sm:$0xff]
    %v576 = vld [vmem:[#allocation5 + $0x8] sm:$0xff]
    %v577 = vld [vmem:[#allocation5 + $0x10] sm:$0xff]
    %v578 = vld [vmem:[#allocation5 + $0x18] sm:$0xff]
    %v579 = vld [vmem:[#allocation5 + $0x20] sm:$0xff]
    %v580 = vld [vmem:[#allocation5 + $0x28] sm:$0xff]
    %v581 = vld [vmem:[#allocation5 + $0x30] sm:$0xff]
    %v582 = vld [vmem:[#allocation5 + $0x38] sm:$0xff]
    %v583 = vld [vmem:[#allocation5 + $0x40] sm:$0xff]
    %v584 = vld [vmem:[#allocation5 + $0x48] sm:$0xff]
    %v585 = vld [vmem:[#allocation5 + $0x50] sm:$0xff]
    %v586 = vld [vmem:[#allocation5 + $0x58] sm:$0xff]
    %v587 = vld [vmem:[#allocation5 + $0x60] sm:$0xff]
    %v588 = vld [vmem:[#allocation5 + $0x68] sm:$0xff]
    %v589 = vld [vmem:[#allocation5 + $0x70] sm:$0xff]
    %v590 = vld [vmem:[#allocation5 + $0x78] sm:$0xff]
    %v591 = vld [vmem:[#allocation5 + $0x80] sm:$0xff]
    %v592 = vld [vmem:[#allocation5 + $0x88] sm:$0xff]
    %v593 = vld [vmem:[#allocation5 + $0x90] sm:$0xff]
    %v594 = vld [vmem:[#allocation5 + $0x98] sm:$0xff]
    %v595 = vld [vmem:[#allocation5 + $0xa0] sm:$0xff]
    %v596 = vld [vmem:[#allocation5 + $0xa8] sm:$0xff]
    %v597 = vld [vmem:[#allocation5 + $0xb0] sm:$0xff]
    %v598 = vld [vmem:[#allocation5 + $0xb8] sm:$0xff]
    %v599 = vld [vmem:[#allocation5 + $0xc0] sm:$0xff]
    %v600 = vld [vmem:[#allocation5 + $0xc8] sm:$0xff]
    %v601 = vld [vmem:[#allocation5 + $0xd0] sm:$0xff]
    %v602 = vld [vmem:[#allocation5 + $0xd8] sm:$0xff]
    %v603 = vld [vmem:[#allocation5 + $0xe0] sm:$0xff]
    %v604 = vld [vmem:[#allocation5 + $0xe8] sm:$0xff]
    %v605 = vld [vmem:[#allocation5 + $0xf0] sm:$0xff]
    %v606 = vld [vmem:[#allocation5 + $0xf8] sm:$0xff]
    %v607 = vld [vmem:[#allocation5 + $0x100] sm:$0xff]
    %v608 = vld [vmem:[#allocation5 + $0x108] sm:$0xff]
    %v609 = vld [vmem:[#allocation5 + $0x110] sm:$0xff]
    %v610 = vld [vmem:[#allocation5 + $0x118] sm:$0xff]
    %v611 = vld [vmem:[#allocation5 + $0x120] sm:$0xff]
    %v612 = vld [vmem:[#allocation5 + $0x128] sm:$0xff]
    %v613 = vld [vmem:[#allocation5 + $0x130] sm:$0xff]
    %v614 = vld [vmem:[#allocation5 + $0x138] sm:$0xff]
    %v615 = vld [vmem:[#allocation5 + $0x140] sm:$0xff]
    %v616 = vld [vmem:[#allocation5 + $0x148] sm:$0xff]
    %v617 = vld [vmem:[#allocation5 + $0x150] sm:$0xff]
    %v618 = vld [vmem:[#allocation5 + $0x158] sm:$0xff]
    %v619 = vld [vmem:[#allocation5 + $0x160] sm:$0xff]
    %v620 = vld [vmem:[#allocation5 + $0x168] sm:$0xff]
    %v621 = vld [vmem:[#allocation5 + $0x170] sm:$0xff]
    %v622 = vld [vmem:[#allocation5 + $0x178] sm:$0xff]
    %v623 = vld [vmem:[#allocation5 + $0x180] sm:$0xff]
    %v624 = vld [vmem:[#allocation5 + $0x188] sm:$0xff]
    %v625 = vld [vmem:[#allocation5 + $0x190] sm:$0xff]
    %v626 = vld [vmem:[#allocation5 + $0x198] sm:$0xff]
    %v627 = vld [vmem:[#allocation5 + $0x1a0] sm:$0xff]
    %v628 = vld [vmem:[#allocation5 + $0x1a8] sm:$0xff]
    %v629 = vld [vmem:[#allocation5 + $0x1b0] sm:$0xff]
    %v630 = vld [vmem:[#allocation5 + $0x1b8] sm:$0xff]
    %v631 = vld [vmem:[#allocation5 + $0x1c0] sm:$0xff]
    %v632 = vld [vmem:[#allocation5 + $0x1c8] sm:$0xff]
    %v633 = vld [vmem:[#allocation5 + $0x1d0] sm:$0xff]
    %v634 = vld [vmem:[#allocation5 + $0x1d8] sm:$0xff]
    %v635 = vld [vmem:[#allocation5 + $0x1e0] sm:$0xff]
    %v636 = vld [vmem:[#allocation5 + $0x1e8] sm:$0xff]
    %v637 = vld [vmem:[#allocation5 + $0x1f0] sm:$0xff]
    %v638 = vld [vmem:[#allocation5 + $0x1f8] sm:$0xff]
    %v639 = vld [vmem:[%s4] sm:$0x3]
    %v641 = vlaneseq
    %v642 = vshrl.u32 %v641, 7
    %v643 = vsub.s32 0, %v642
    %v644 = vrot.slane %v639, %v643
    %v645 = vlaneseq
    %v646 = vshrl.u32 %v645, 7
    %v647 = vsub.s32 1, %v646
    %v648 = vrot.slane %v639, %v647
    %v715 = vunpack.c.l.b16 %v575
    %v716 = vunpack.c.h.b16 %v575
    %v717 = vunpack.c.l.b16 %v576
    %v718 = vunpack.c.h.b16 %v576
    %v719 = vunpack.c.l.b16 %v577
    %v720 = vunpack.c.h.b16 %v577
    %v721 = vunpack.c.l.b16 %v578
    %v722 = vunpack.c.h.b16 %v578
    %v723 = vunpack.c.l.b16 %v579
    %v724 = vunpack.c.h.b16 %v579
    %v725 = vunpack.c.l.b16 %v580
    %v726 = vunpack.c.h.b16 %v580
    %v727 = vunpack.c.l.b16 %v581
    %v728 = vunpack.c.h.b16 %v581
    %v729 = vunpack.c.l.b16 %v582
    %v730 = vunpack.c.h.b16 %v582
    %v731 = vunpack.c.l.b16 %v583
    %v732 = vunpack.c.h.b16 %v583
    %v733 = vunpack.c.l.b16 %v584
    %v734 = vunpack.c.h.b16 %v584
    %v735 = vunpack.c.l.b16 %v585
    %v736 = vunpack.c.h.b16 %v585
    %v737 = vunpack.c.l.b16 %v586
    %v738 = vunpack.c.h.b16 %v586
    %v739 = vunpack.c.l.b16 %v587
    %v740 = vunpack.c.h.b16 %v587
    %v741 = vunpack.c.l.b16 %v588
    %v742 = vunpack.c.h.b16 %v588
    %v743 = vunpack.c.l.b16 %v589
    %v744 = vunpack.c.h.b16 %v589
    %v745 = vunpack.c.l.b16 %v590
    %v746 = vunpack.c.h.b16 %v590
    %v747 = vunpack.c.l.b16 %v591
    %v748 = vunpack.c.h.b16 %v591
    %v749 = vunpack.c.l.b16 %v592
    %v750 = vunpack.c.h.b16 %v592
    %v751 = vunpack.c.l.b16 %v593
    %v752 = vunpack.c.h.b16 %v593
    %v753 = vunpack.c.l.b16 %v594
    %v754 = vunpack.c.h.b16 %v594
    %v755 = vunpack.c.l.b16 %v595
    %v756 = vunpack.c.h.b16 %v595
    %v757 = vunpack.c.l.b16 %v596
    %v758 = vunpack.c.h.b16 %v596
    %v759 = vunpack.c.l.b16 %v597
    %v760 = vunpack.c.h.b16 %v597
    %v761 = vunpack.c.l.b16 %v598
    %v762 = vunpack.c.h.b16 %v598
    %v763 = vunpack.c.l.b16 %v599
    %v764 = vunpack.c.h.b16 %v599
    %v765 = vunpack.c.l.b16 %v600
    %v766 = vunpack.c.h.b16 %v600
    %v767 = vunpack.c.l.b16 %v601
    %v768 = vunpack.c.h.b16 %v601
    %v769 = vunpack.c.l.b16 %v602
    %v770 = vunpack.c.h.b16 %v602
    %v771 = vunpack.c.l.b16 %v603
    %v772 = vunpack.c.h.b16 %v603
    %v773 = vunpack.c.l.b16 %v604
    %v774 = vunpack.c.h.b16 %v604
    %v775 = vunpack.c.l.b16 %v605
    %v776 = vunpack.c.h.b16 %v605
    %v777 = vunpack.c.l.b16 %v606
    %v778 = vunpack.c.h.b16 %v606
    %v779 = vunpack.c.l.b16 %v607
    %v780 = vunpack.c.h.b16 %v607
    %v781 = vunpack.c.l.b16 %v608
    %v782 = vunpack.c.h.b16 %v608
    %v783 = vunpack.c.l.b16 %v609
    %v784 = vunpack.c.h.b16 %v609
    %v785 = vunpack.c.l.b16 %v610
    %v786 = vunpack.c.h.b16 %v610
    %v787 = vunpack.c.l.b16 %v611
    %v788 = vunpack.c.h.b16 %v611
    %v789 = vunpack.c.l.b16 %v612
    %v790 = vunpack.c.h.b16 %v612
    %v791 = vunpack.c.l.b16 %v613
    %v792 = vunpack.c.h.b16 %v613
    %v793 = vunpack.c.l.b16 %v614
    %v794 = vunpack.c.h.b16 %v614
    %v795 = vunpack.c.l.b16 %v615
    %v796 = vunpack.c.h.b16 %v615
    %v797 = vunpack.c.l.b16 %v616
    %v798 = vunpack.c.h.b16 %v616
    %v799 = vunpack.c.l.b16 %v617
    %v800 = vunpack.c.h.b16 %v617
    %v801 = vunpack.c.l.b16 %v618
    %v802 = vunpack.c.h.b16 %v618
    %v803 = vunpack.c.l.b16 %v619
    %v804 = vunpack.c.h.b16 %v619
    %v805 = vunpack.c.l.b16 %v620
    %v806 = vunpack.c.h.b16 %v620
    %v807 = vunpack.c.l.b16 %v621
    %v808 = vunpack.c.h.b16 %v621
    %v809 = vunpack.c.l.b16 %v622
    %v810 = vunpack.c.h.b16 %v622
    %v811 = vunpack.c.l.b16 %v623
    %v812 = vunpack.c.h.b16 %v623
    %v813 = vunpack.c.l.b16 %v624
    %v814 = vunpack.c.h.b16 %v624
    %v815 = vunpack.c.l.b16 %v625
    %v816 = vunpack.c.h.b16 %v625
    %v817 = vunpack.c.l.b16 %v626
    %v818 = vunpack.c.h.b16 %v626
    %v819 = vunpack.c.l.b16 %v627
    %v820 = vunpack.c.h.b16 %v627
    %v821 = vunpack.c.l.b16 %v628
    %v822 = vunpack.c.h.b16 %v628
    %v823 = vunpack.c.l.b16 %v629
    %v824 = vunpack.c.h.b16 %v629
    %v825 = vunpack.c.l.b16 %v630
    %v826 = vunpack.c.h.b16 %v630
    %v827 = vunpack.c.l.b16 %v631
    %v828 = vunpack.c.h.b16 %v631
    %v829 = vunpack.c.l.b16 %v632
    %v830 = vunpack.c.h.b16 %v632
    %v831 = vunpack.c.l.b16 %v633
    %v832 = vunpack.c.h.b16 %v633
    %v833 = vunpack.c.l.b16 %v634
    %v834 = vunpack.c.h.b16 %v634
    %v835 = vunpack.c.l.b16 %v635
    %v836 = vunpack.c.h.b16 %v635
    %v837 = vunpack.c.l.b16 %v636
    %v838 = vunpack.c.h.b16 %v636
    %v839 = vunpack.c.l.b16 %v637
    %v840 = vunpack.c.h.b16 %v637
    %v841 = vunpack.c.l.b16 %v638
    %v842 = vunpack.c.h.b16 %v638
    %v843 = vpack.c.b16 %v717, %v715
    %v844 = vpack.c.b16 %v718, %v716
    %v845 = vpack.c.b16 %v721, %v719
    %v846 = vpack.c.b16 %v722, %v720
    %v847 = vpack.c.b16 %v725, %v723
    %v848 = vpack.c.b16 %v726, %v724
    %v849 = vpack.c.b16 %v729, %v727
    %v850 = vpack.c.b16 %v730, %v728
    %v851 = vpack.c.b16 %v733, %v731
    %v852 = vpack.c.b16 %v734, %v732
    %v853 = vpack.c.b16 %v737, %v735
    %v854 = vpack.c.b16 %v738, %v736
    %v855 = vpack.c.b16 %v741, %v739
    %v856 = vpack.c.b16 %v742, %v740
    %v857 = vpack.c.b16 %v745, %v743
    %v858 = vpack.c.b16 %v746, %v744
    %v859 = vpack.c.b16 %v749, %v747
    %v860 = vpack.c.b16 %v750, %v748
    %v861 = vpack.c.b16 %v753, %v751
    %v862 = vpack.c.b16 %v754, %v752
    %v863 = vpack.c.b16 %v757, %v755
    %v864 = vpack.c.b16 %v758, %v756
    %v865 = vpack.c.b16 %v761, %v759
    %v866 = vpack.c.b16 %v762, %v760
    %v867 = vpack.c.b16 %v765, %v763
    %v868 = vpack.c.b16 %v766, %v764
    %v869 = vpack.c.b16 %v769, %v767
    %v870 = vpack.c.b16 %v770, %v768
    %v871 = vpack.c.b16 %v773, %v771
    %v872 = vpack.c.b16 %v774, %v772
    %v873 = vpack.c.b16 %v777, %v775
    %v874 = vpack.c.b16 %v778, %v776
    %v875 = vpack.c.b16 %v781, %v779
    %v876 = vpack.c.b16 %v782, %v780
    %v877 = vpack.c.b16 %v785, %v783
    %v878 = vpack.c.b16 %v786, %v784
    %v879 = vpack.c.b16 %v789, %v787
    %v880 = vpack.c.b16 %v790, %v788
    %v881 = vpack.c.b16 %v793, %v791
    %v882 = vpack.c.b16 %v794, %v792
    %v883 = vpack.c.b16 %v797, %v795
    %v884 = vpack.c.b16 %v798, %v796
    %v885 = vpack.c.b16 %v801, %v799
    %v886 = vpack.c.b16 %v802, %v800
    %v887 = vpack.c.b16 %v805, %v803
    %v888 = vpack.c.b16 %v806, %v804
    %v889 = vpack.c.b16 %v809, %v807
    %v890 = vpack.c.b16 %v810, %v808
    %v891 = vpack.c.b16 %v813, %v811
    %v892 = vpack.c.b16 %v814, %v812
    %v893 = vpack.c.b16 %v817, %v815
    %v894 = vpack.c.b16 %v818, %v816
    %v895 = vpack.c.b16 %v821, %v819
    %v896 = vpack.c.b16 %v822, %v820
    %v897 = vpack.c.b16 %v825, %v823
    %v898 = vpack.c.b16 %v826, %v824
    %v899 = vpack.c.b16 %v829, %v827
    %v900 = vpack.c.b16 %v830, %v828
    %v901 = vpack.c.b16 %v833, %v831
    %v902 = vpack.c.b16 %v834, %v832
    %v903 = vpack.c.b16 %v837, %v835
    %v904 = vpack.c.b16 %v838, %v836
    %v905 = vpack.c.b16 %v841, %v839
    %v906 = vpack.c.b16 %v842, %v840
    %971 = vmatprep.subr.bf16.mxu0 %v844
    %972 = vmatpush1.bf16.msra.mxu0 %v843
    %973 = vmatprep.subr.bf16.mxu0 %v846
    %974 = vmatpush1.bf16.msra.mxu0 %v845
    %975 = vmatprep.subr.bf16.mxu0 %v848
    %976 = vmatpush1.bf16.msra.mxu0 %v847
    %977 = vmatprep.subr.bf16.mxu0 %v850
    %978 = vmatpush1.bf16.msra.mxu0 %v849
    %979 = vmatprep.subr.bf16.mxu0 %v852
    %980 = vmatpush1.bf16.msra.mxu0 %v851
    %981 = vmatprep.subr.bf16.mxu0 %v854
    %982 = vmatpush1.bf16.msra.mxu0 %v853
    %983 = vmatprep.subr.bf16.mxu0 %v856
    %984 = vmatpush1.bf16.msra.mxu0 %v855
    %985 = vmatprep.subr.bf16.mxu0 %v858
    %986 = vmatpush1.bf16.msra.mxu0 %v857
    %987 = vmatprep.subr.bf16.mxu0 %v860
    %988 = vmatpush1.bf16.msra.mxu0 %v859
    %989 = vmatprep.subr.bf16.mxu0 %v862
    %990 = vmatpush1.bf16.msra.mxu0 %v861
    %991 = vmatprep.subr.bf16.mxu0 %v864
    %992 = vmatpush1.bf16.msra.mxu0 %v863
    %993 = vmatprep.subr.bf16.mxu0 %v866
    %994 = vmatpush1.bf16.msra.mxu0 %v865
    %995 = vmatprep.subr.bf16.mxu0 %v868
    %996 = vmatpush1.bf16.msra.mxu0 %v867
    %997 = vmatprep.subr.bf16.mxu0 %v870
    %998 = vmatpush1.bf16.msra.mxu0 %v869
    %999 = vmatprep.subr.bf16.mxu0 %v872
    %1000 = vmatpush1.bf16.msra.mxu0 %v871
    %1001 = vmatprep.subr.bf16.mxu0 %v874
    %1002 = vmatpush1.bf16.msra.mxu0 %v873
    %1003 = vmatprep.mubr.bf16.mxu0 %v572
    %1004 = vmatmul.mubr.bf16.gmra.mrb[0].mxu0 %v571
    %v1005 = vpop.f32.mrb[0].mxu0
    %v1006 = vadd.f32 %v644, %v1005
    %v1007 = vpop.f32.mrb[0].mxu0
    %v1008 = vadd.f32 %v648, %v1007
    %v1009 = vpop.f32.mrb[0].mxu0
    %v1010 = vadd.f32 %v644, %v1009
    %v1011 = vpop.f32.mrb[0].mxu0
    %v1012 = vadd.f32 %v648, %v1011
    %1013 = vdwg.mxu0
    %1014 = vmatprep.subr.bf16.mxu0 %v876
    %1015 = vmatpush1.bf16.msra.mxu0 %v875
    %1016 = vmatprep.subr.bf16.mxu0 %v878
    %1017 = vmatpush1.bf16.msra.mxu0 %v877
    %1018 = vmatprep.subr.bf16.mxu0 %v880
    %1019 = vmatpush1.bf16.msra.mxu0 %v879
    %1020 = vmatprep.subr.bf16.mxu0 %v882
    %1021 = vmatpush1.bf16.msra.mxu0 %v881
    %1022 = vmatprep.subr.bf16.mxu0 %v884
    %1023 = vmatpush1.bf16.msra.mxu0 %v883
    %1024 = vmatprep.subr.bf16.mxu0 %v886
    %1025 = vmatpush1.bf16.msra.mxu0 %v885
    %1026 = vmatprep.subr.bf16.mxu0 %v888
    %1027 = vmatpush1.bf16.msra.mxu0 %v887
    %1028 = vmatprep.subr.bf16.mxu0 %v890
    %1029 = vmatpush1.bf16.msra.mxu0 %v889
    %1030 = vmatprep.subr.bf16.mxu0 %v892
    %1031 = vmatpush1.bf16.msra.mxu0 %v891
    %1032 = vmatprep.subr.bf16.mxu0 %v894
    %1033 = vmatpush1.bf16.msra.mxu0 %v893
    %1034 = vmatprep.subr.bf16.mxu0 %v896
    %1035 = vmatpush1.bf16.msra.mxu0 %v895
    %1036 = vmatprep.subr.bf16.mxu0 %v898
    %1037 = vmatpush1.bf16.msra.mxu0 %v897
    %1038 = vmatprep.subr.bf16.mxu0 %v900
    %1039 = vmatpush1.bf16.msra.mxu0 %v899
    %1040 = vmatprep.subr.bf16.mxu0 %v902
    %1041 = vmatpush1.bf16.msra.mxu0 %v901
    %1042 = vmatprep.subr.bf16.mxu0 %v904
    %1043 = vmatpush1.bf16.msra.mxu0 %v903
    %1044 = vmatprep.subr.bf16.mxu0 %v906
    %1045 = vmatpush1.bf16.msra.mxu0 %v905
    %1046 = vmatprep.mubr.bf16.mxu0 %v574
    %1047 = vmatmul.mubr.bf16.gmra.mrb[0].mxu0 %v573
    %v1048 = vpop.f32.mrb[0].mxu0
    %v1049 = vadd.f32 %v1006, %v1048
    %v1050 = vpop.f32.mrb[0].mxu0
    %v1051 = vadd.f32 %v1008, %v1050
    %v1052 = vpop.f32.mrb[0].mxu0
    %v1053 = vadd.f32 %v1010, %v1052
    %v1054 = vpop.f32.mrb[0].mxu0
    %v1055 = vadd.f32 %v1012, %v1054
    %1056 = vdwg.mxu0
    %v1057 = vmul.f32 %v1049, 0.2
    %v1058 = vmul.f32 %v1051, 0.2
    %v1059 = vmul.f32 %v1053, 0.2
    %v1060 = vmul.f32 %v1055, 0.2
    %v1061 = vmax.f32 %v1049, %v1057
    %v1062 = vmax.f32 %v1051, %v1058
    %v1063 = vmax.f32 %v1053, %v1059
    %v1064 = vmax.f32 %v1055, %v1060
    %v1065 = vpack.c.bf16 %v1063, %v1061
    %v1066 = vpack.c.bf16 %v1064, %v1062
    %v1067 = vld [vmem:[%s5] sm:$0xf]
    %v1068 = vld [vmem:[%s5 + $0x4] sm:$0xf]
    %v1069 = vld [vmem:[%s5 + $0x8] sm:$0xf]
    %v1070 = vld [vmem:[%s5 + $0xc] sm:$0xf]
    %v1071 = vld [vmem:[%s5 + $0x10] sm:$0xf]
    %v1072 = vld [vmem:[%s5 + $0x14] sm:$0xf]
    %v1073 = vld [vmem:[%s5 + $0x18] sm:$0xf]
    %v1074 = vld [vmem:[%s5 + $0x1c] sm:$0xf]
    %v1075 = vld [vmem:[%s5 + $0x20] sm:$0xf]
    %v1076 = vld [vmem:[%s5 + $0x24] sm:$0xf]
    %v1077 = vld [vmem:[%s5 + $0x28] sm:$0xf]
    %v1078 = vld [vmem:[%s5 + $0x2c] sm:$0xf]
    %v1079 = vld [vmem:[%s5 + $0x30] sm:$0xf]
    %v1080 = vld [vmem:[%s5 + $0x34] sm:$0xf]
    %v1081 = vld [vmem:[%s5 + $0x38] sm:$0xf]
    %v1082 = vld [vmem:[%s5 + $0x3c] sm:$0xf]
    %v1083 = vld [vmem:[%s5 + $0x40] sm:$0xf]
    %v1084 = vld [vmem:[%s5 + $0x44] sm:$0xf]
    %v1085 = vld [vmem:[%s5 + $0x48] sm:$0xf]
    %v1086 = vld [vmem:[%s5 + $0x4c] sm:$0xf]
    %v1087 = vld [vmem:[%s5 + $0x50] sm:$0xf]
    %v1088 = vld [vmem:[%s5 + $0x54] sm:$0xf]
    %v1089 = vld [vmem:[%s5 + $0x58] sm:$0xf]
    %v1090 = vld [vmem:[%s5 + $0x5c] sm:$0xf]
    %v1091 = vld [vmem:[%s5 + $0x60] sm:$0xf]
    %v1092 = vld [vmem:[%s5 + $0x64] sm:$0xf]
    %v1093 = vld [vmem:[%s5 + $0x68] sm:$0xf]
    %v1094 = vld [vmem:[%s5 + $0x6c] sm:$0xf]
    %v1095 = vld [vmem:[%s5 + $0x70] sm:$0xf]
    %v1096 = vld [vmem:[%s5 + $0x74] sm:$0xf]
    %v1097 = vld [vmem:[%s5 + $0x78] sm:$0xf]
    %v1098 = vld [vmem:[%s5 + $0x7c] sm:$0xf]
    %v1099 = vld [vmem:[#allocation2] sm:$0x1]
    %v1101 = vlaneseq
    %v1102 = vshrl.u32 %v1101, 7
    %v1103 = vsub.s32 0, %v1102
    %v1104 = vrot.slane %v1099, %v1103
    %v1138 = vunpack.c.l.b16 %v1067
    %v1139 = vunpack.c.l.b16 %v1068
    %v1140 = vunpack.c.l.b16 %v1069
    %v1141 = vunpack.c.l.b16 %v1070
    %v1142 = vunpack.c.l.b16 %v1071
    %v1143 = vunpack.c.l.b16 %v1072
    %v1144 = vunpack.c.l.b16 %v1073
    %v1145 = vunpack.c.l.b16 %v1074
    %v1146 = vunpack.c.l.b16 %v1075
    %v1147 = vunpack.c.l.b16 %v1076
    %v1148 = vunpack.c.l.b16 %v1077
    %v1149 = vunpack.c.l.b16 %v1078
    %v1150 = vunpack.c.l.b16 %v1079
    %v1151 = vunpack.c.l.b16 %v1080
    %v1152 = vunpack.c.l.b16 %v1081
    %v1153 = vunpack.c.l.b16 %v1082
    %v1154 = vunpack.c.l.b16 %v1083
    %v1155 = vunpack.c.l.b16 %v1084
    %v1156 = vunpack.c.l.b16 %v1085
    %v1157 = vunpack.c.l.b16 %v1086
    %v1158 = vunpack.c.l.b16 %v1087
    %v1159 = vunpack.c.l.b16 %v1088
    %v1160 = vunpack.c.l.b16 %v1089
    %v1161 = vunpack.c.l.b16 %v1090
    %v1162 = vunpack.c.l.b16 %v1091
    %v1163 = vunpack.c.l.b16 %v1092
    %v1164 = vunpack.c.l.b16 %v1093
    %v1165 = vunpack.c.l.b16 %v1094
    %v1166 = vunpack.c.l.b16 %v1095
    %v1167 = vunpack.c.l.b16 %v1096
    %v1168 = vunpack.c.l.b16 %v1097
    %v1169 = vunpack.c.l.b16 %v1098
    %v1170 = vpack.c.b16 %v1139, %v1138
    %v1171 = vpack.c.b16 %v1141, %v1140
    %v1172 = vpack.c.b16 %v1143, %v1142
    %v1173 = vpack.c.b16 %v1145, %v1144
    %v1174 = vpack.c.b16 %v1147, %v1146
    %v1175 = vpack.c.b16 %v1149, %v1148
    %v1176 = vpack.c.b16 %v1151, %v1150
    %v1177 = vpack.c.b16 %v1153, %v1152
    %v1178 = vpack.c.b16 %v1155, %v1154
    %v1179 = vpack.c.b16 %v1157, %v1156
    %v1180 = vpack.c.b16 %v1159, %v1158
    %v1181 = vpack.c.b16 %v1161, %v1160
    %v1182 = vpack.c.b16 %v1163, %v1162
    %v1183 = vpack.c.b16 %v1165, %v1164
    %v1184 = vpack.c.b16 %v1167, %v1166
    %v1185 = vpack.c.b16 %v1169, %v1168
    %1202 = vmatprep.subr.bf16.mxu0 0
    %1203 = vmatpush1.bf16.msra.mxu0 %v1170
    %1204 = vmatprep.subr.bf16.mxu0 0
    %1205 = vmatpush1.bf16.msra.mxu0 %v1171
    %1206 = vmatprep.subr.bf16.mxu0 0
    %1207 = vmatpush1.bf16.msra.mxu0 %v1172
    %1208 = vmatprep.subr.bf16.mxu0 0
    %1209 = vmatpush1.bf16.msra.mxu0 %v1173
    %1210 = vmatprep.subr.bf16.mxu0 0
    %1211 = vmatpush1.bf16.msra.mxu0 %v1174
    %1212 = vmatprep.subr.bf16.mxu0 0
    %1213 = vmatpush1.bf16.msra.mxu0 %v1175
    %1214 = vmatprep.subr.bf16.mxu0 0
    %1215 = vmatpush1.bf16.msra.mxu0 %v1176
    %1216 = vmatprep.subr.bf16.mxu0 0
    %1217 = vmatpush1.bf16.msra.mxu0 %v1177
    %1218 = vmatprep.subr.bf16.mxu0 0
    %1219 = vmatpush1.bf16.msra.mxu0 %v1178
    %1220 = vmatprep.subr.bf16.mxu0 0
    %1221 = vmatpush1.bf16.msra.mxu0 %v1179
    %1222 = vmatprep.subr.bf16.mxu0 0
    %1223 = vmatpush1.bf16.msra.mxu0 %v1180
    %1224 = vmatprep.subr.bf16.mxu0 0
    %1225 = vmatpush1.bf16.msra.mxu0 %v1181
    %1226 = vmatprep.subr.bf16.mxu0 0
    %1227 = vmatpush1.bf16.msra.mxu0 %v1182
    %1228 = vmatprep.subr.bf16.mxu0 0
    %1229 = vmatpush1.bf16.msra.mxu0 %v1183
    %1230 = vmatprep.subr.bf16.mxu0 0
    %1231 = vmatpush1.bf16.msra.mxu0 %v1184
    %1232 = vmatprep.subr.bf16.mxu0 0
    %1233 = vmatpush1.bf16.msra.mxu0 %v1185
    %1234 = vmatprep.mubr.bf16.mxu0 %v1066
    %1235 = vmatmul.mubr.bf16.gmra.mrb[0].mxu0 %v1065
    %v1236 = vpop.f32.mrb[0].mxu0
    %v1237 = vadd.f32 %v1104, %v1236
    %v1238 = vpop.f32.mrb[0].mxu0
    %v1239 = vpop.f32.mrb[0].mxu0
    %v1240 = vadd.f32 %v1104, %v1239
    %v1241 = vpop.f32.mrb[0].mxu0
    %1242 = vdwg.mxu0
    %vm1243 = vcmask 7168
    %1244 = vst.msk [vmem:[%s7] sm:$0xff] %vm1243, %v1237
    %1245 = vst.msk [vmem:[%s7 + $0x8] sm:$0xff] %vm1243, %v1240
    // Predicated region
    $region38: #{tpu_custom_call.1} parent=1 // pred_check
      _
    $region39: #{tpu_custom_call.1} parent=1 // pred_check_branch
      %1247 = sbr.rel (0) target = $region41
    $region40: #{tpu_custom_call.1} parent=1 // pred_region
      _
    $region41: #{tpu_custom_call.1} parent=1 // pred_fallthru
      _
    // Predicated region
    $region42: #{tpu_custom_call.1} parent=1 // pred_check
      _
    $region43: #{tpu_custom_call.1} parent=1 // pred_check_branch
      %1249 = sbr.rel (0) target = $region45
    $region44: #{tpu_custom_call.1} parent=1 // pred_region
      _
    $region45: #{tpu_custom_call.1} parent=1 // pred_fallthru
      _
    %1250 = vsyncpa [#allocation4], 1
    %1251 = vsyncpa [#allocation6], 1

</llo_original>
